<compile_context>
chip_gen: v7x
topology: tpu7x:2x2x1
jax: 0.10.0
libtpu: 0.0.40
codegen_flags: <defaults>
</compile_context>

<pallas_src>
import math
from functools import partial

import jax
import jax.numpy as jnp
from jax import lax
from jax.experimental import pallas as pl
from jax.experimental.pallas import tpu as pltpu


# ---------------------------------------------------------------------------
# Pallas kernel: flash-style attention with optional additive bias.
# One (batch, q-tile, kv-tile) step; all H heads handled inside the step.
# ---------------------------------------------------------------------------
def _flash_attn_kernel(*refs, scale, heads, head_dim, has_bias):
    if has_bias:
        q_ref, k_ref, v_ref, b_ref, o_ref, m_ref, l_ref, acc_ref = refs
    else:
        q_ref, k_ref, v_ref, o_ref, m_ref, l_ref, acc_ref = refs
        b_ref = None

    kv = pl.program_id(2)
    neg_inf = jnp.float32(-jnp.inf)

    def head_update(h, is_first):
        sl = pl.ds(h * head_dim, head_dim)
        # Scale folded into Q: tq*D multiplies instead of tq*tk on the scores.
        q_h = q_ref[0, :, sl] * scale   # (tq, D), native dtype (bf16 stays bf16)
        k_h = k_ref[0, :, sl]           # (tk, D)
        v_h = v_ref[0, :, sl]           # (tk, D)

        # scores = (Q*scale) K^T (+ bias): contract last dims directly
        # (no k.T / XLU transpose), f32 MXU accumulation.
        s = lax.dot_general(q_h, k_h, (((1,), (1,)), ((), ())),
                            preferred_element_type=jnp.float32)
        if b_ref is not None:
            # Bias upcast happens here; callers may stream it as bf16.
            s = s + b_ref[0, h].astype(jnp.float32)

        row_max = jnp.max(s, axis=-1, keepdims=True)
        if is_first:
            m_new = row_max
            # -inf guard for fully-masked rows (exp(-inf - (-inf)) -> NaN).
            m_safe = jnp.where(m_new == neg_inf, 0.0, m_new)
            p = jnp.exp(s - m_safe)                              # (tq, tk) f32
            l_ref[h] = jnp.sum(p, axis=-1, keepdims=True)
            acc_ref[h] = jnp.dot(p.astype(v_h.dtype), v_h,
                                 preferred_element_type=jnp.float32)
        else:
            m_prev = m_ref[h]                                    # (tq, 1)
            m_new = jnp.maximum(m_prev, row_max)
            m_safe = jnp.where(m_new == neg_inf, 0.0, m_new)
            alpha = jnp.exp(m_prev - m_safe)                     # f32 VPU/EUP
            p = jnp.exp(s - m_safe)                              # (tq, tk) f32
            l_ref[h] = alpha * l_ref[h] + jnp.sum(p, axis=-1, keepdims=True)
            acc_ref[h] = alpha * acc_ref[h] + jnp.dot(
                p.astype(v_h.dtype), v_h, preferred_element_type=jnp.float32)
        m_ref[h] = m_new

    # Static unroll over heads (each head: (tq,D)x(tk,D) score matmul + online
    # softmax update).  First kv step skips the zero-init / alpha rescale.
    # TODO(synk): for very large H (>= ~16) a lax.fori_loop over heads would
    # bound vreg live-ranges, but dynamic lane-offset slicing of the H*D axis
    # is not cleanly supported; keep the static unroll here.
    @pl.when(kv == 0)
    def _first_step():
        for h in range(heads):
            head_update(h, is_first=True)

    @pl.when(kv > 0)
    def _rest_steps():
        for h in range(heads):
            head_update(h, is_first=False)

    @pl.when(kv == pl.num_programs(2) - 1)
    def _finalize():
        # Assemble all H normalized heads into one lane-dense (tq, H*D) slab
        # and issue a single store (no masked vst of width D).  Exact (not
        # approx) reciprocal: once per q tile, negligible cost.
        outs = []
        for h in range(heads):
            inv_l = pl.reciprocal(l_ref[h], approx=False)
            outs.append(acc_ref[h] * inv_l)
        o_ref[0] = jnp.concatenate(outs, axis=-1).astype(o_ref.dtype)


def _pick_tile(extent, target, align, *, cap=4096):
    """Largest multiple of `align` that divides `extent` and is <= target.

    Falls back to the full extent only when that stays under `cap` (the bias
    block and the f32 s/p temporaries are O(tile^2)); otherwise fails loudly.
    """
    if extent <= target:
        return extent
    t = (min(target, extent) // align) * align
    while t >= align:
        if extent % t == 0:
            return t
        t -= align
    if extent <= cap:
        return extent
    # TODO(synk): pad+mask tail path for sequence lengths with no aligned divisor.
    raise ValueError(
        f"no {align}-aligned tile <= {target} divides extent {extent}; "
        f"pad the sequence length or add a masked tail path")


def _vmem_and_tile_defaults(has_bias):
    """Generation-aware VMEM limit and default tile sizes."""
    try:
        vmem_bytes = int(pltpu.get_tpu_info().vmem_capacity_bytes)
    except Exception:
        vmem_bytes = 64 * 1024 * 1024  # conservative (v7x-class) fallback
    if vmem_bytes <= 64 * 1024 * 1024:
        # v7x: 64 MiB per TensorCore.  Leave headroom for Mosaic temporaries
        # (the (tq,tk) f32 score/prob buffers) and shrink the with-bias
        # working set (bias double buffer is the dominant VMEM term).
        vmem_limit = int(vmem_bytes * 0.8)
        q_tile, k_tile = (256, 256) if has_bias else (256, 512)
    else:
        # v5e / v6e: 128 MiB -> bigger tiles, fewer ~0.35us grid-step
        # overheads and fewer kv revolutions of the acc rescale RMW.
        vmem_limit = min(100 * 1024 * 1024, int(vmem_bytes * 0.8))
        q_tile, k_tile = (512, 512) if has_bias else (512, 1024)
    return q_tile, k_tile, vmem_limit


def _local_attention_pallas(q, k, v, attn_bias=None, *, q_tile=None, k_tile=None):
    """q, k, v: [B, S, H, D]; attn_bias: [B, H, S, S] or None -> [B, S, H, D].

    attn_bias may be supplied in bf16 (recommended: generate it bf16 upstream,
    do not astype in a wrapper) to halve the dominant S^2 HBM stream; it is
    upcast to f32 inside the kernel only for the pre-softmax add.
    """
    B, S, H, D = q.shape
    HD = H * D
    scale = 1.0 / math.sqrt(D)
    has_bias = attn_bias is not None

    dq, dk, vmem_limit = _vmem_and_tile_defaults(has_bias)
    q_tile = dq if q_tile is None else q_tile
    k_tile = dk if k_tile is None else k_tile

    # q-tile is a second-to-last block dim: 16-aligned (bf16 packs 16 sublanes
    # per vreg); k-tile is the lane dim of the bias block: 128-aligned.
    tq = _pick_tile(S, q_tile, 16)
    tk = _pick_tile(S, k_tile, 128)

    # v7x has two TensorCores: keep the 'parallel' grid extent >= 2 so both
    # cores get work (irrelevant on single-TC v5e/v6e).
    if B * (S // tq) < 2:
        half = _pick_tile(S, max(16, tq // 2), 16)
        if S // half >= 2:
            tq = half

    # [B, S, H, D] -> [B, S, H*D]: contiguous reshape, no extra HBM pass.
    qf = q.reshape(B, S, HD)
    kf = k.reshape(B, S, HD)
    vf = v.reshape(B, S, HD)

    q_spec = pl.BlockSpec((1, tq, HD), lambda b, qi, ki: (b, qi, 0))
    kv_spec = pl.BlockSpec((1, tk, HD), lambda b, qi, ki: (b, ki, 0))
    out_spec = pl.BlockSpec((1, tq, HD), lambda b, qi, ki: (b, qi, 0))

    in_specs = [q_spec, kv_spec, kv_spec]
    inputs = [qf, kf, vf]
    if has_bias:
        in_specs.append(
            pl.BlockSpec((1, H, tq, tk), lambda b, qi, ki: (b, 0, qi, ki)))
        inputs.append(attn_bias)

    # Advisory cost estimate for the XLA scheduler around the custom call.
    itemsize = jnp.dtype(q.dtype).itemsize
    bytes_accessed = 4 * B * S * HD * itemsize                     # q, k, v, out
    if has_bias:
        bytes_accessed += B * H * S * S * jnp.dtype(attn_bias.dtype).itemsize
    cost = pl.CostEstimate(flops=4 * B * H * S * S * D,
                           transcendentals=B * H * S * S,
                           bytes_accessed=bytes_accessed)

    out = pl.pallas_call(
        partial(_flash_attn_kernel, scale=scale, heads=H, head_dim=D,
                has_bias=has_bias),
        out_shape=jax.ShapeDtypeStruct((B, S, HD), q.dtype),
        grid_spec=pltpu.PrefetchScalarGridSpec(
            num_scalar_prefetch=0,
            grid=(B, S // tq, S // tk),
            in_specs=in_specs,
            out_specs=out_spec,
            scratch_shapes=[
                pltpu.VMEM((H, tq, 1), jnp.float32),   # running max m
                pltpu.VMEM((H, tq, 1), jnp.float32),   # running denom l
                pltpu.VMEM((H, tq, D), jnp.float32),   # f32 output accumulator
            ],
        ),
        compiler_params=pltpu.CompilerParams(
            dimension_semantics=("parallel", "parallel", "arbitrary"),
            vmem_limit_bytes=vmem_limit,
        ),
        cost_estimate=cost,
    )(*inputs)

    # [B, S, H*D] -> [B, S, H, D]: contiguous reshape, free.
    return out.reshape(B, S, H, D)


# ---------------------------------------------------------------------------
# _SeqAllToAll equivalent (single-device: sequence-parallel world size == 1
# makes the split / all_to_all / cat an identity).
# ---------------------------------------------------------------------------
def _seq_all_to_all(x, scatter_idx, gather_idx, seq_world_size=1):
    if seq_world_size == 1:
        return x
    # TODO(synk): multi-device path would use shard_map + lax.all_to_all over
    # the sequence-parallel mesh axis; not exercised in this single-device script.
    raise NotImplementedError


# ---------------------------------------------------------------------------
# DistributedAttentionNoMerge forward
# ---------------------------------------------------------------------------
class DistributedAttentionNoMerge:
    def __init__(self, local_attention, scatter_idx=2, gather_idx=1,
                 seq_world_size=1):
        self.local_attn = local_attention
        self.scatter_idx = scatter_idx
        self.gather_idx = gather_idx
        self.seq_world_size = seq_world_size
        self.training = False  # eval-mode semantics (no all-to-all / token-0 ops)

    def __call__(self, query, key, value, attn_bias, edge_index, attn_type, *args):
        if self.training:
            query_layer = _seq_all_to_all(query, self.scatter_idx, self.gather_idx,
                                          self.seq_world_size)
            key_layer = _seq_all_to_all(key, self.scatter_idx, self.gather_idx,
                                        self.seq_world_size)
            value_layer = _seq_all_to_all(value, self.scatter_idx, self.gather_idx,
                                          self.seq_world_size)
            if attn_bias is not None:
                attn_bias_layer = _seq_all_to_all(attn_bias, 3, 1, self.seq_world_size)
                # TODO(synk): extend_global_token0 is defined elsewhere in gt_sp and
                # only matters for world_size > 1; identity for world_size == 1.
            else:
                attn_bias_layer = attn_bias
        else:
            query_layer, key_layer, value_layer = query, key, value
            attn_bias_layer = attn_bias

        context_layer = self.local_attn(query_layer, key_layer, value_layer,
                                        attn_bias_layer, edge_index, attn_type, *args)

        if self.training:
            # TODO(synk): copy_global_token0 is defined elsewhere in gt_sp; identity
            # for world_size == 1.
            output = _seq_all_to_all(context_layer, self.gather_idx, self.scatter_idx,
                                     self.seq_world_size)
        else:
            output = context_layer
        return output


def _local_attn(q, k, v, attn_bias, edge_index, attn_type, *args):
    # Dense multi-head attention with optional additive bias (graph edge_index /
    # attn_type are accepted to match the gt_sp signature; ignored here).
    return _local_attention_pallas(q, k, v, attn_bias)


# ---------------------------------------------------------------------------
# Reference (pure JAX) for a correctness check.
# ---------------------------------------------------------------------------
def _reference_attention(q, k, v, attn_bias):
    B, S, H, D = q.shape
    scale = 1.0 / math.sqrt(D)
    qh = jnp.transpose(q, (0, 2, 1, 3)).astype(jnp.float32)  # [B,H,S,D]
    kh = jnp.transpose(k, (0, 2, 1, 3)).astype(jnp.float32)
    vh = jnp.transpose(v, (0, 2, 1, 3)).astype(jnp.float32)
    s = jnp.einsum("bhqd,bhkd->bhqk", qh, kh) * scale
    if attn_bias is not None:
        s = s + attn_bias.astype(jnp.float32)
    p = jax.nn.softmax(s, axis=-1)
    o = jnp.einsum("bhqk,bhkd->bhqd", p, vh)
    return jnp.transpose(o, (0, 2, 1, 3)).astype(q.dtype)


if __name__ == "__main__":
    rng = jax.random.PRNGKey(0)
    edge_index = jnp.zeros((2, 1), dtype=jnp.int32)  # unused by dense local attn
    attn_type = "full"
    module = DistributedAttentionNoMerge(_local_attn, scatter_idx=2, gather_idx=1)

    # --- Case 1: small single-tile path, bf16 bias (H*D = 128 -> lane dense) --
    B, S, H, D = 2, 8, 4, 32
    kq, kk, kv_, kb = jax.random.split(rng, 4)
    query = jax.random.normal(kq, (B, S, H, D), dtype=jnp.float32)
    key_t = jax.random.normal(kk, (B, S, H, D), dtype=jnp.float32)
    value = jax.random.normal(kv_, (B, S, H, D), dtype=jnp.float32)
    # Bias generated in bf16 upstream (recommended streaming dtype).
    attn_bias = (0.1 * jax.random.normal(kb, (B, H, S, S), dtype=jnp.float32)
                 ).astype(jnp.bfloat16)

    out = module(query, key_t, value, attn_bias, edge_index, attn_type)
    out = jax.block_until_ready(out)
    ref = _reference_attention(query, key_t, value, attn_bias)
    assert out.shape == (B, S, H, D)
    assert jnp.allclose(out, ref, atol=2e-3, rtol=2e-3), "mismatch vs reference (bias)"

    # --- Case 2: no-bias path (no zero-bias materialization / streaming) -----
    out_nb = module(query, key_t, value, None, edge_index, attn_type)
    out_nb = jax.block_until_ready(out_nb)
    ref_nb = _reference_attention(query, key_t, value, None)
    assert jnp.allclose(out_nb, ref_nb, atol=2e-3, rtol=2e-3), \
        "mismatch vs reference (no bias)"

    # --- Case 3: multi kv-step online softmax (exercises first-step fast path,
    #     alpha rescale, and the multi-tile grid) with bf16 bias -------------
    B2, S2, H2, D2 = 2, 256, 4, 32
    kq2, kk2, kv2, kb2 = jax.random.split(jax.random.PRNGKey(1), 4)
    q2 = jax.random.normal(kq2, (B2, S2, H2, D2), dtype=jnp.float32)
    k2 = jax.random.normal(kk2, (B2, S2, H2, D2), dtype=jnp.float32)
    v2 = jax.random.normal(kv2, (B2, S2, H2, D2), dtype=jnp.float32)
    b2 = (0.1 * jax.random.normal(kb2, (B2, H2, S2, S2), dtype=jnp.float32)
          ).astype(jnp.bfloat16)
    out2 = _local_attention_pallas(q2, k2, v2, b2, q_tile=128, k_tile=128)
    out2 = jax.block_until_ready(out2)
    ref2 = _reference_attention(q2, k2, v2, b2)
    assert jnp.allclose(out2, ref2, atol=2e-3, rtol=2e-3), \
        "mismatch vs reference (multi kv-step)"

    print("KERNEL_OK")
</pallas_src>

<mosaic_0001>
module attributes {stable_mosaic.version = 11 : i64} {
  func.func @_flash_attn_kernel(%arg0: i32, %arg1: i32, %arg2: i32, %arg3: memref<1x8x128xf32, #tpu.memory_space<vmem>>, %arg4: memref<1x8x128xf32, #tpu.memory_space<vmem>>, %arg5: memref<1x8x128xf32, #tpu.memory_space<vmem>>, %arg6: memref<1x4x8x8xbf16, #tpu.memory_space<vmem>>, %arg7: memref<1x8x128xf32, #tpu.memory_space<vmem>>, %arg8: memref<4x8x1xf32, #tpu.memory_space<vmem>>, %arg9: memref<4x8x1xf32, #tpu.memory_space<vmem>>, %arg10: memref<4x8x32xf32, #tpu.memory_space<vmem>>) attributes {dimension_semantics = [#tpu.dimension_semantics<parallel>, #tpu.dimension_semantics<parallel>, #tpu.dimension_semantics<arbitrary>], iteration_bounds = array<i64: 2, 1, 1>, scalar_prefetch = 0 : i64, scratch_operands = 3 : i64, tpu.core_type = #tpu.core_type<tc>, window_params = [{transform_indices = @transform_0, window_bounds = array<i64: 1, 8, 128>}, {transform_indices = @transform_1, window_bounds = array<i64: 1, 8, 128>}, {transform_indices = @transform_2, window_bounds = array<i64: 1, 8, 128>}, {transform_indices = @transform_3, window_bounds = array<i64: 1, 4, 8, 8>}, {transform_indices = @transform_4, window_bounds = array<i64: 1, 8, 128>}]} {
    %c0_i32 = arith.constant 0 : i32
    %0 = arith.cmpi eq, %arg2, %c0_i32 : i32
    %1 = arith.extui %0 : i1 to i32
    %cst = arith.constant 0xFF800000 : f32
    %c0_i32_0 = arith.constant 0 : i32
    %2 = arith.cmpi ne, %1, %c0_i32_0 : i32
    scf.if %2 {
      %c0 = arith.constant 0 : index
      %c0_6 = arith.constant 0 : index
      %c0_7 = arith.constant 0 : index
      %9 = vector.load %arg3[%c0, %c0_6, %c0_7] : memref<1x8x128xf32, #tpu.memory_space<vmem>>, vector<1x8x32xf32>
      %10 = vector.shape_cast %9 : vector<1x8x32xf32> to vector<8x32xf32>
      %cst_8 = arith.constant 0.176776692 : f32
      %11 = vector.broadcast %cst_8 : f32 to vector<8x32xf32>
      %12 = arith.mulf %10, %11 : vector<8x32xf32>
      %c0_9 = arith.constant 0 : index
      %c0_10 = arith.constant 0 : index
      %c0_11 = arith.constant 0 : index
      %13 = vector.load %arg4[%c0_9, %c0_10, %c0_11] : memref<1x8x128xf32, #tpu.memory_space<vmem>>, vector<1x8x32xf32>
      %14 = vector.shape_cast %13 : vector<1x8x32xf32> to vector<8x32xf32>
      %c0_12 = arith.constant 0 : index
      %c0_13 = arith.constant 0 : index
      %c0_14 = arith.constant 0 : index
      %15 = vector.load %arg5[%c0_12, %c0_13, %c0_14] : memref<1x8x128xf32, #tpu.memory_space<vmem>>, vector<1x8x32xf32>
      %16 = vector.shape_cast %15 : vector<1x8x32xf32> to vector<8x32xf32>
      %cst_15 = arith.constant dense<0.000000e+00> : vector<8x8xf32>
      %17 = tpu.matmul %12, %14, %cst_15 {dimension_numbers = #tpu.dot_dimension_numbers<[1], [1], [0], [0], [0, 0, 1, 0], [], []>} : vector<8x32xf32>, vector<8x32xf32>, vector<8x8xf32> -> vector<8x8xf32>
      %c0_16 = arith.constant 0 : index
      %c0_17 = arith.constant 0 : index
      %c0_18 = arith.constant 0 : index
      %c0_19 = arith.constant 0 : index
      %18 = vector.load %arg6[%c0_16, %c0_17, %c0_18, %c0_19] : memref<1x4x8x8xbf16, #tpu.memory_space<vmem>>, vector<1x1x8x8xbf16>
      %19 = vector.shape_cast %18 : vector<1x1x8x8xbf16> to vector<8x8xbf16>
      %20 = arith.extf %19 : vector<8x8xbf16> to vector<8x8xf32>
      %21 = arith.addf %17, %20 : vector<8x8xf32>
      %cst_20 = arith.constant dense<0xFF800000> : vector<8xf32>
      %22 = vector.multi_reduction <maximumf>, %21, %cst_20 [1] : vector<8x8xf32> to vector<8xf32>
      %23 = vector.shape_cast %22 : vector<8xf32> to vector<8x1xf32>
      %24 = vector.broadcast %cst : f32 to vector<8x1xf32>
      %25 = arith.cmpf oeq, %23, %24 : vector<8x1xf32>
      %cst_21 = arith.constant 0.000000e+00 : f32
      %26 = vector.broadcast %cst_21 : f32 to vector<8x1xf32>
      %27 = arith.select %25, %26, %23 : vector<8x1xi1>, vector<8x1xf32>
      %28 = vector.broadcast %27 : vector<8x1xf32> to vector<8x8xf32>
      %29 = arith.subf %21, %28 : vector<8x8xf32>
      %30 = math.exp %29 : vector<8x8xf32>
      %cst_22 = arith.constant dense<0.000000e+00> : vector<8xf32>
      %31 = vector.multi_reduction <add>, %30, %cst_22 [1] : vector<8x8xf32> to vector<8xf32>
      %32 = vector.shape_cast %31 : vector<8xf32> to vector<8x1xf32>
      %c0_23 = arith.constant 0 : index
      %c0_24 = arith.constant 0 : index
      %c0_25 = arith.constant 0 : index
      %33 = vector.load %arg9[%c0_23, %c0_24, %c0_25] : memref<4x8x1xf32, #tpu.memory_space<vmem>>, vector<1x8x1xf32>
      %34 = vector.shape_cast %33 : vector<1x8x1xf32> to vector<8x1xf32>
      %35 = vector.shape_cast %32 : vector<8x1xf32> to vector<1x8x1xf32>
      tpu.vector_store %arg9[%c0_23, %c0_24, %c0_25], %35 {strides = array<i32>} : memref<4x8x1xf32, #tpu.memory_space<vmem>>, vector<1x8x1xf32>,
      %cst_26 = arith.constant dense<0.000000e+00> : vector<8x32xf32>
      %36 = tpu.matmul %30, %16, %cst_26 {dimension_numbers = #tpu.dot_dimension_numbers<[1], [0], [0], [1], [0, 0, 1, 1], [], []>} : vector<8x8xf32>, vector<8x32xf32>, vector<8x32xf32> -> vector<8x32xf32>
      %c0_27 = arith.constant 0 : index
      %c0_28 = arith.constant 0 : index
      %c0_29 = arith.constant 0 : index
      %37 = vector.load %arg10[%c0_27, %c0_28, %c0_29] : memref<4x8x32xf32, #tpu.memory_space<vmem>>, vector<1x8x32xf32>
      %38 = vector.shape_cast %37 : vector<1x8x32xf32> to vector<8x32xf32>
      %39 = vector.shape_cast %36 : vector<8x32xf32> to vector<1x8x32xf32>
      tpu.vector_store %arg10[%c0_27, %c0_28, %c0_29], %39 {strides = array<i32>} : memref<4x8x32xf32, #tpu.memory_space<vmem>>, vector<1x8x32xf32>,
      %c0_30 = arith.constant 0 : index
      %c0_31 = arith.constant 0 : index
      %c0_32 = arith.constant 0 : index
      %40 = vector.load %arg8[%c0_30, %c0_31, %c0_32] : memref<4x8x1xf32, #tpu.memory_space<vmem>>, vector<1x8x1xf32>
      %41 = vector.shape_cast %40 : vector<1x8x1xf32> to vector<8x1xf32>
      %42 = vector.shape_cast %23 : vector<8x1xf32> to vector<1x8x1xf32>
      tpu.vector_store %arg8[%c0_30, %c0_31, %c0_32], %42 {strides = array<i32>} : memref<4x8x1xf32, #tpu.memory_space<vmem>>, vector<1x8x1xf32>,
      %c0_33 = arith.constant 0 : index
      %c0_34 = arith.constant 0 : index
      %c32 = arith.constant 32 : index
      %43 = vector.load %arg3[%c0_33, %c0_34, %c32] : memref<1x8x128xf32, #tpu.memory_space<vmem>>, vector<1x8x32xf32>
      %44 = vector.shape_cast %43 : vector<1x8x32xf32> to vector<8x32xf32>
      %cst_35 = arith.constant 0.176776692 : f32
      %45 = vector.broadcast %cst_35 : f32 to vector<8x32xf32>
      %46 = arith.mulf %44, %45 : vector<8x32xf32>
      %c0_36 = arith.constant 0 : index
      %c0_37 = arith.constant 0 : index
      %c32_38 = arith.constant 32 : index
      %47 = vector.load %arg4[%c0_36, %c0_37, %c32_38] : memref<1x8x128xf32, #tpu.memory_space<vmem>>, vector<1x8x32xf32>
      %48 = vector.shape_cast %47 : vector<1x8x32xf32> to vector<8x32xf32>
      %c0_39 = arith.constant 0 : index
      %c0_40 = arith.constant 0 : index
      %c32_41 = arith.constant 32 : index
      %49 = vector.load %arg5[%c0_39, %c0_40, %c32_41] : memref<1x8x128xf32, #tpu.memory_space<vmem>>, vector<1x8x32xf32>
      %50 = vector.shape_cast %49 : vector<1x8x32xf32> to vector<8x32xf32>
      %cst_42 = arith.constant dense<0.000000e+00> : vector<8x8xf32>
      %51 = tpu.matmul %46, %48, %cst_42 {dimension_numbers = #tpu.dot_dimension_numbers<[1], [1], [0], [0], [0, 0, 1, 0], [], []>} : vector<8x32xf32>, vector<8x32xf32>, vector<8x8xf32> -> vector<8x8xf32>
      %c0_43 = arith.constant 0 : index
      %c1 = arith.constant 1 : index
      %c0_44 = arith.constant 0 : index
      %c0_45 = arith.constant 0 : index
      %52 = vector.load %arg6[%c0_43, %c1, %c0_44, %c0_45] : memref<1x4x8x8xbf16, #tpu.memory_space<vmem>>, vector<1x1x8x8xbf16>
      %53 = vector.shape_cast %52 : vector<1x1x8x8xbf16> to vector<8x8xbf16>
      %54 = arith.extf %53 : vector<8x8xbf16> to vector<8x8xf32>
      %55 = arith.addf %51, %54 : vector<8x8xf32>
      %cst_46 = arith.constant dense<0xFF800000> : vector<8xf32>
      %56 = vector.multi_reduction <maximumf>, %55, %cst_46 [1] : vector<8x8xf32> to vector<8xf32>
      %57 = vector.shape_cast %56 : vector<8xf32> to vector<8x1xf32>
      %58 = vector.broadcast %cst : f32 to vector<8x1xf32>
      %59 = arith.cmpf oeq, %57, %58 : vector<8x1xf32>
      %cst_47 = arith.constant 0.000000e+00 : f32
      %60 = vector.broadcast %cst_47 : f32 to vector<8x1xf32>
      %61 = arith.select %59, %60, %57 : vector<8x1xi1>, vector<8x1xf32>
      %62 = vector.broadcast %61 : vector<8x1xf32> to vector<8x8xf32>
      %63 = arith.subf %55, %62 : vector<8x8xf32>
      %64 = math.exp %63 : vector<8x8xf32>
      %cst_48 = arith.constant dense<0.000000e+00> : vector<8xf32>
      %65 = vector.multi_reduction <add>, %64, %cst_48 [1] : vector<8x8xf32> to vector<8xf32>
      %66 = vector.shape_cast %65 : vector<8xf32> to vector<8x1xf32>
      %c1_49 = arith.constant 1 : index
      %c0_50 = arith.constant 0 : index
      %c0_51 = arith.constant 0 : index
      %67 = vector.load %arg9[%c1_49, %c0_50, %c0_51] : memref<4x8x1xf32, #tpu.memory_space<vmem>>, vector<1x8x1xf32>
      %68 = vector.shape_cast %67 : vector<1x8x1xf32> to vector<8x1xf32>
      %69 = vector.shape_cast %66 : vector<8x1xf32> to vector<1x8x1xf32>
      tpu.vector_store %arg9[%c1_49, %c0_50, %c0_51], %69 {strides = array<i32>} : memref<4x8x1xf32, #tpu.memory_space<vmem>>, vector<1x8x1xf32>,
      %cst_52 = arith.constant dense<0.000000e+00> : vector<8x32xf32>
      %70 = tpu.matmul %64, %50, %cst_52 {dimension_numbers = #tpu.dot_dimension_numbers<[1], [0], [0], [1], [0, 0, 1, 1], [], []>} : vector<8x8xf32>, vector<8x32xf32>, vector<8x32xf32> -> vector<8x32xf32>
      %c1_53 = arith.constant 1 : index
      %c0_54 = arith.constant 0 : index
      %c0_55 = arith.constant 0 : index
      %71 = vector.load %arg10[%c1_53, %c0_54, %c0_55] : memref<4x8x32xf32, #tpu.memory_space<vmem>>, vector<1x8x32xf32>
      %72 = vector.shape_cast %71 : vector<1x8x32xf32> to vector<8x32xf32>
      %73 = vector.shape_cast %70 : vector<8x32xf32> to vector<1x8x32xf32>
      tpu.vector_store %arg10[%c1_53, %c0_54, %c0_55], %73 {strides = array<i32>} : memref<4x8x32xf32, #tpu.memory_space<vmem>>, vector<1x8x32xf32>,
      %c1_56 = arith.constant 1 : index
      %c0_57 = arith.constant 0 : index
      %c0_58 = arith.constant 0 : index
      %74 = vector.load %arg8[%c1_56, %c0_57, %c0_58] : memref<4x8x1xf32, #tpu.memory_space<vmem>>, vector<1x8x1xf32>
      %75 = vector.shape_cast %74 : vector<1x8x1xf32> to vector<8x1xf32>
      %76 = vector.shape_cast %57 : vector<8x1xf32> to vector<1x8x1xf32>
      tpu.vector_store %arg8[%c1_56, %c0_57, %c0_58], %76 {strides = array<i32>} : memref<4x8x1xf32, #tpu.memory_space<vmem>>, vector<1x8x1xf32>,
      %c0_59 = arith.constant 0 : index
      %c0_60 = arith.constant 0 : index
      %c64 = arith.constant 64 : index
      %77 = vector.load %arg3[%c0_59, %c0_60, %c64] : memref<1x8x128xf32, #tpu.memory_space<vmem>>, vector<1x8x32xf32>
      %78 = vector.shape_cast %77 : vector<1x8x32xf32> to vector<8x32xf32>
      %cst_61 = arith.constant 0.176776692 : f32
      %79 = vector.broadcast %cst_61 : f32 to vector<8x32xf32>
      %80 = arith.mulf %78, %79 : vector<8x32xf32>
      %c0_62 = arith.constant 0 : index
      %c0_63 = arith.constant 0 : index
      %c64_64 = arith.constant 64 : index
      %81 = vector.load %arg4[%c0_62, %c0_63, %c64_64] : memref<1x8x128xf32, #tpu.memory_space<vmem>>, vector<1x8x32xf32>
      %82 = vector.shape_cast %81 : vector<1x8x32xf32> to vector<8x32xf32>
      %c0_65 = arith.constant 0 : index
      %c0_66 = arith.constant 0 : index
      %c64_67 = arith.constant 64 : index
      %83 = vector.load %arg5[%c0_65, %c0_66, %c64_67] : memref<1x8x128xf32, #tpu.memory_space<vmem>>, vector<1x8x32xf32>
      %84 = vector.shape_cast %83 : vector<1x8x32xf32> to vector<8x32xf32>
      %cst_68 = arith.constant dense<0.000000e+00> : vector<8x8xf32>
      %85 = tpu.matmul %80, %82, %cst_68 {dimension_numbers = #tpu.dot_dimension_numbers<[1], [1], [0], [0], [0, 0, 1, 0], [], []>} : vector<8x32xf32>, vector<8x32xf32>, vector<8x8xf32> -> vector<8x8xf32>
      %c0_69 = arith.constant 0 : index
      %c2 = arith.constant 2 : index
      %c0_70 = arith.constant 0 : index
      %c0_71 = arith.constant 0 : index
      %86 = vector.load %arg6[%c0_69, %c2, %c0_70, %c0_71] : memref<1x4x8x8xbf16, #tpu.memory_space<vmem>>, vector<1x1x8x8xbf16>
      %87 = vector.shape_cast %86 : vector<1x1x8x8xbf16> to vector<8x8xbf16>
      %88 = arith.extf %87 : vector<8x8xbf16> to vector<8x8xf32>
      %89 = arith.addf %85, %88 : vector<8x8xf32>
      %cst_72 = arith.constant dense<0xFF800000> : vector<8xf32>
      %90 = vector.multi_reduction <maximumf>, %89, %cst_72 [1] : vector<8x8xf32> to vector<8xf32>
      %91 = vector.shape_cast %90 : vector<8xf32> to vector<8x1xf32>
      %92 = vector.broadcast %cst : f32 to vector<8x1xf32>
      %93 = arith.cmpf oeq, %91, %92 : vector<8x1xf32>
      %cst_73 = arith.constant 0.000000e+00 : f32
      %94 = vector.broadcast %cst_73 : f32 to vector<8x1xf32>
      %95 = arith.select %93, %94, %91 : vector<8x1xi1>, vector<8x1xf32>
      %96 = vector.broadcast %95 : vector<8x1xf32> to vector<8x8xf32>
      %97 = arith.subf %89, %96 : vector<8x8xf32>
      %98 = math.exp %97 : vector<8x8xf32>
      %cst_74 = arith.constant dense<0.000000e+00> : vector<8xf32>
      %99 = vector.multi_reduction <add>, %98, %cst_74 [1] : vector<8x8xf32> to vector<8xf32>
      %100 = vector.shape_cast %99 : vector<8xf32> to vector<8x1xf32>
      %c2_75 = arith.constant 2 : index
      %c0_76 = arith.constant 0 : index
      %c0_77 = arith.constant 0 : index
      %101 = vector.load %arg9[%c2_75, %c0_76, %c0_77] : memref<4x8x1xf32, #tpu.memory_space<vmem>>, vector<1x8x1xf32>
      %102 = vector.shape_cast %101 : vector<1x8x1xf32> to vector<8x1xf32>
      %103 = vector.shape_cast %100 : vector<8x1xf32> to vector<1x8x1xf32>
      tpu.vector_store %arg9[%c2_75, %c0_76, %c0_77], %103 {strides = array<i32>} : memref<4x8x1xf32, #tpu.memory_space<vmem>>, vector<1x8x1xf32>,
      %cst_78 = arith.constant dense<0.000000e+00> : vector<8x32xf32>
      %104 = tpu.matmul %98, %84, %cst_78 {dimension_numbers = #tpu.dot_dimension_numbers<[1], [0], [0], [1], [0, 0, 1, 1], [], []>} : vector<8x8xf32>, vector<8x32xf32>, vector<8x32xf32> -> vector<8x32xf32>
      %c2_79 = arith.constant 2 : index
      %c0_80 = arith.constant 0 : index
      %c0_81 = arith.constant 0 : index
      %105 = vector.load %arg10[%c2_79, %c0_80, %c0_81] : memref<4x8x32xf32, #tpu.memory_space<vmem>>, vector<1x8x32xf32>
      %106 = vector.shape_cast %105 : vector<1x8x32xf32> to vector<8x32xf32>
      %107 = vector.shape_cast %104 : vector<8x32xf32> to vector<1x8x32xf32>
      tpu.vector_store %arg10[%c2_79, %c0_80, %c0_81], %107 {strides = array<i32>} : memref<4x8x32xf32, #tpu.memory_space<vmem>>, vector<1x8x32xf32>,
      %c2_82 = arith.constant 2 : index
      %c0_83 = arith.constant 0 : index
      %c0_84 = arith.constant 0 : index
      %108 = vector.load %arg8[%c2_82, %c0_83, %c0_84] : memref<4x8x1xf32, #tpu.memory_space<vmem>>, vector<1x8x1xf32>
      %109 = vector.shape_cast %108 : vector<1x8x1xf32> to vector<8x1xf32>
      %110 = vector.shape_cast %91 : vector<8x1xf32> to vector<1x8x1xf32>
      tpu.vector_store %arg8[%c2_82, %c0_83, %c0_84], %110 {strides = array<i32>} : memref<4x8x1xf32, #tpu.memory_space<vmem>>, vector<1x8x1xf32>,
      %c0_85 = arith.constant 0 : index
      %c0_86 = arith.constant 0 : index
      %c96 = arith.constant 96 : index
      %111 = vector.load %arg3[%c0_85, %c0_86, %c96] : memref<1x8x128xf32, #tpu.memory_space<vmem>>, vector<1x8x32xf32>
      %112 = vector.shape_cast %111 : vector<1x8x32xf32> to vector<8x32xf32>
      %cst_87 = arith.constant 0.176776692 : f32
      %113 = vector.broadcast %cst_87 : f32 to vector<8x32xf32>
      %114 = arith.mulf %112, %113 : vector<8x32xf32>
      %c0_88 = arith.constant 0 : index
      %c0_89 = arith.constant 0 : index
      %c96_90 = arith.constant 96 : index
      %115 = vector.load %arg4[%c0_88, %c0_89, %c96_90] : memref<1x8x128xf32, #tpu.memory_space<vmem>>, vector<1x8x32xf32>
      %116 = vector.shape_cast %115 : vector<1x8x32xf32> to vector<8x32xf32>
      %c0_91 = arith.constant 0 : index
      %c0_92 = arith.constant 0 : index
      %c96_93 = arith.constant 96 : index
      %117 = vector.load %arg5[%c0_91, %c0_92, %c96_93] : memref<1x8x128xf32, #tpu.memory_space<vmem>>, vector<1x8x32xf32>
      %118 = vector.shape_cast %117 : vector<1x8x32xf32> to vector<8x32xf32>
      %cst_94 = arith.constant dense<0.000000e+00> : vector<8x8xf32>
      %119 = tpu.matmul %114, %116, %cst_94 {dimension_numbers = #tpu.dot_dimension_numbers<[1], [1], [0], [0], [0, 0, 1, 0], [], []>} : vector<8x32xf32>, vector<8x32xf32>, vector<8x8xf32> -> vector<8x8xf32>
      %c0_95 = arith.constant 0 : index
      %c3 = arith.constant 3 : index
      %c0_96 = arith.constant 0 : index
      %c0_97 = arith.constant 0 : index
      %120 = vector.load %arg6[%c0_95, %c3, %c0_96, %c0_97] : memref<1x4x8x8xbf16, #tpu.memory_space<vmem>>, vector<1x1x8x8xbf16>
      %121 = vector.shape_cast %120 : vector<1x1x8x8xbf16> to vector<8x8xbf16>
      %122 = arith.extf %121 : vector<8x8xbf16> to vector<8x8xf32>
      %123 = arith.addf %119, %122 : vector<8x8xf32>
      %cst_98 = arith.constant dense<0xFF800000> : vector<8xf32>
      %124 = vector.multi_reduction <maximumf>, %123, %cst_98 [1] : vector<8x8xf32> to vector<8xf32>
      %125 = vector.shape_cast %124 : vector<8xf32> to vector<8x1xf32>
      %126 = vector.broadcast %cst : f32 to vector<8x1xf32>
      %127 = arith.cmpf oeq, %125, %126 : vector<8x1xf32>
      %cst_99 = arith.constant 0.000000e+00 : f32
      %128 = vector.broadcast %cst_99 : f32 to vector<8x1xf32>
      %129 = arith.select %127, %128, %125 : vector<8x1xi1>, vector<8x1xf32>
      %130 = vector.broadcast %129 : vector<8x1xf32> to vector<8x8xf32>
      %131 = arith.subf %123, %130 : vector<8x8xf32>
      %132 = math.exp %131 : vector<8x8xf32>
      %cst_100 = arith.constant dense<0.000000e+00> : vector<8xf32>
      %133 = vector.multi_reduction <add>, %132, %cst_100 [1] : vector<8x8xf32> to vector<8xf32>
      %134 = vector.shape_cast %133 : vector<8xf32> to vector<8x1xf32>
      %c3_101 = arith.constant 3 : index
      %c0_102 = arith.constant 0 : index
      %c0_103 = arith.constant 0 : index
      %135 = vector.load %arg9[%c3_101, %c0_102, %c0_103] : memref<4x8x1xf32, #tpu.memory_space<vmem>>, vector<1x8x1xf32>
      %136 = vector.shape_cast %135 : vector<1x8x1xf32> to vector<8x1xf32>
      %137 = vector.shape_cast %134 : vector<8x1xf32> to vector<1x8x1xf32>
      tpu.vector_store %arg9[%c3_101, %c0_102, %c0_103], %137 {strides = array<i32>} : memref<4x8x1xf32, #tpu.memory_space<vmem>>, vector<1x8x1xf32>,
      %cst_104 = arith.constant dense<0.000000e+00> : vector<8x32xf32>
      %138 = tpu.matmul %132, %118, %cst_104 {dimension_numbers = #tpu.dot_dimension_numbers<[1], [0], [0], [1], [0, 0, 1, 1], [], []>} : vector<8x8xf32>, vector<8x32xf32>, vector<8x32xf32> -> vector<8x32xf32>
      %c3_105 = arith.constant 3 : index
      %c0_106 = arith.constant 0 : index
      %c0_107 = arith.constant 0 : index
      %139 = vector.load %arg10[%c3_105, %c0_106, %c0_107] : memref<4x8x32xf32, #tpu.memory_space<vmem>>, vector<1x8x32xf32>
      %140 = vector.shape_cast %139 : vector<1x8x32xf32> to vector<8x32xf32>
      %141 = vector.shape_cast %138 : vector<8x32xf32> to vector<1x8x32xf32>
      tpu.vector_store %arg10[%c3_105, %c0_106, %c0_107], %141 {strides = array<i32>} : memref<4x8x32xf32, #tpu.memory_space<vmem>>, vector<1x8x32xf32>,
      %c3_108 = arith.constant 3 : index
      %c0_109 = arith.constant 0 : index
      %c0_110 = arith.constant 0 : index
      %142 = vector.load %arg8[%c3_108, %c0_109, %c0_110] : memref<4x8x1xf32, #tpu.memory_space<vmem>>, vector<1x8x1xf32>
      %143 = vector.shape_cast %142 : vector<1x8x1xf32> to vector<8x1xf32>
      %144 = vector.shape_cast %125 : vector<8x1xf32> to vector<1x8x1xf32>
      tpu.vector_store %arg8[%c3_108, %c0_109, %c0_110], %144 {strides = array<i32>} : memref<4x8x1xf32, #tpu.memory_space<vmem>>, vector<1x8x1xf32>,
    } else {
    }
    %c0_i32_1 = arith.constant 0 : i32
    %3 = arith.cmpi sgt, %arg2, %c0_i32_1 : i32
    %4 = arith.extui %3 : i1 to i32
    %cst_2 = arith.constant 0xFF800000 : f32
    %c0_i32_3 = arith.constant 0 : i32
    %5 = arith.cmpi ne, %4, %c0_i32_3 : i32
    scf.if %5 {
      %c0 = arith.constant 0 : index
      %c0_6 = arith.constant 0 : index
      %c0_7 = arith.constant 0 : index
      %9 = vector.load %arg3[%c0, %c0_6, %c0_7] : memref<1x8x128xf32, #tpu.memory_space<vmem>>, vector<1x8x32xf32>
      %10 = vector.shape_cast %9 : vector<1x8x32xf32> to vector<8x32xf32>
      %cst_8 = arith.constant 0.176776692 : f32
      %11 = vector.broadcast %cst_8 : f32 to vector<8x32xf32>
      %12 = arith.mulf %10, %11 : vector<8x32xf32>
      %c0_9 = arith.constant 0 : index
      %c0_10 = arith.constant 0 : index
      %c0_11 = arith.constant 0 : index
      %13 = vector.load %arg4[%c0_9, %c0_10, %c0_11] : memref<1x8x128xf32, #tpu.memory_space<vmem>>, vector<1x8x32xf32>
      %14 = vector.shape_cast %13 : vector<1x8x32xf32> to vector<8x32xf32>
      %c0_12 = arith.constant 0 : index
      %c0_13 = arith.constant 0 : index
      %c0_14 = arith.constant 0 : index
      %15 = vector.load %arg5[%c0_12, %c0_13, %c0_14] : memref<1x8x128xf32, #tpu.memory_space<vmem>>, vector<1x8x32xf32>
      %16 = vector.shape_cast %15 : vector<1x8x32xf32> to vector<8x32xf32>
      %cst_15 = arith.constant dense<0.000000e+00> : vector<8x8xf32>
      %17 = tpu.matmul %12, %14, %cst_15 {dimension_numbers = #tpu.dot_dimension_numbers<[1], [1], [0], [0], [0, 0, 1, 0], [], []>} : vector<8x32xf32>, vector<8x32xf32>, vector<8x8xf32> -> vector<8x8xf32>
      %c0_16 = arith.constant 0 : index
      %c0_17 = arith.constant 0 : index
      %c0_18 = arith.constant 0 : index
      %c0_19 = arith.constant 0 : index
      %18 = vector.load %arg6[%c0_16, %c0_17, %c0_18, %c0_19] : memref<1x4x8x8xbf16, #tpu.memory_space<vmem>>, vector<1x1x8x8xbf16>
      %19 = vector.shape_cast %18 : vector<1x1x8x8xbf16> to vector<8x8xbf16>
      %20 = arith.extf %19 : vector<8x8xbf16> to vector<8x8xf32>
      %21 = arith.addf %17, %20 : vector<8x8xf32>
      %cst_20 = arith.constant dense<0xFF800000> : vector<8xf32>
      %22 = vector.multi_reduction <maximumf>, %21, %cst_20 [1] : vector<8x8xf32> to vector<8xf32>
      %23 = vector.shape_cast %22 : vector<8xf32> to vector<8x1xf32>
      %c0_21 = arith.constant 0 : index
      %c0_22 = arith.constant 0 : index
      %c0_23 = arith.constant 0 : index
      %24 = vector.load %arg8[%c0_21, %c0_22, %c0_23] : memref<4x8x1xf32, #tpu.memory_space<vmem>>, vector<1x8x1xf32>
      %25 = vector.shape_cast %24 : vector<1x8x1xf32> to vector<8x1xf32>
      %26 = arith.maximumf %25, %23 : vector<8x1xf32>
      %27 = vector.broadcast %cst_2 : f32 to vector<8x1xf32>
      %28 = arith.cmpf oeq, %26, %27 : vector<8x1xf32>
      %cst_24 = arith.constant 0.000000e+00 : f32
      %29 = vector.broadcast %cst_24 : f32 to vector<8x1xf32>
      %30 = arith.select %28, %29, %26 : vector<8x1xi1>, vector<8x1xf32>
      %31 = arith.subf %25, %30 : vector<8x1xf32>
      %32 = math.exp %31 : vector<8x1xf32>
      %33 = vector.broadcast %30 : vector<8x1xf32> to vector<8x8xf32>
      %34 = arith.subf %21, %33 : vector<8x8xf32>
      %35 = math.exp %34 : vector<8x8xf32>
      %c0_25 = arith.constant 0 : index
      %c0_26 = arith.constant 0 : index
      %c0_27 = arith.constant 0 : index
      %36 = vector.load %arg9[%c0_25, %c0_26, %c0_27] : memref<4x8x1xf32, #tpu.memory_space<vmem>>, vector<1x8x1xf32>
      %37 = vector.shape_cast %36 : vector<1x8x1xf32> to vector<8x1xf32>
      %38 = arith.mulf %32, %37 : vector<8x1xf32>
      %cst_28 = arith.constant dense<0.000000e+00> : vector<8xf32>
      %39 = vector.multi_reduction <add>, %35, %cst_28 [1] : vector<8x8xf32> to vector<8xf32>
      %40 = vector.shape_cast %39 : vector<8xf32> to vector<8x1xf32>
      %41 = arith.addf %38, %40 : vector<8x1xf32>
      %c0_29 = arith.constant 0 : index
      %c0_30 = arith.constant 0 : index
      %c0_31 = arith.constant 0 : index
      %42 = vector.load %arg9[%c0_29, %c0_30, %c0_31] : memref<4x8x1xf32, #tpu.memory_space<vmem>>, vector<1x8x1xf32>
      %43 = vector.shape_cast %42 : vector<1x8x1xf32> to vector<8x1xf32>
      %44 = vector.shape_cast %41 : vector<8x1xf32> to vector<1x8x1xf32>
      tpu.vector_store %arg9[%c0_29, %c0_30, %c0_31], %44 {strides = array<i32>} : memref<4x8x1xf32, #tpu.memory_space<vmem>>, vector<1x8x1xf32>,
      %c0_32 = arith.constant 0 : index
      %c0_33 = arith.constant 0 : index
      %c0_34 = arith.constant 0 : index
      %45 = vector.load %arg10[%c0_32, %c0_33, %c0_34] : memref<4x8x32xf32, #tpu.memory_space<vmem>>, vector<1x8x32xf32>
      %46 = vector.shape_cast %45 : vector<1x8x32xf32> to vector<8x32xf32>
      %47 = vector.broadcast %32 : vector<8x1xf32> to vector<8x32xf32>
      %48 = arith.mulf %47, %46 : vector<8x32xf32>
      %cst_35 = arith.constant dense<0.000000e+00> : vector<8x32xf32>
      %49 = tpu.matmul %35, %16, %cst_35 {dimension_numbers = #tpu.dot_dimension_numbers<[1], [0], [0], [1], [0, 0, 1, 1], [], []>} : vector<8x8xf32>, vector<8x32xf32>, vector<8x32xf32> -> vector<8x32xf32>
      %50 = arith.addf %48, %49 : vector<8x32xf32>
      %c0_36 = arith.constant 0 : index
      %c0_37 = arith.constant 0 : index
      %c0_38 = arith.constant 0 : index
      %51 = vector.load %arg10[%c0_36, %c0_37, %c0_38] : memref<4x8x32xf32, #tpu.memory_space<vmem>>, vector<1x8x32xf32>
      %52 = vector.shape_cast %51 : vector<1x8x32xf32> to vector<8x32xf32>
      %53 = vector.shape_cast %50 : vector<8x32xf32> to vector<1x8x32xf32>
      tpu.vector_store %arg10[%c0_36, %c0_37, %c0_38], %53 {strides = array<i32>} : memref<4x8x32xf32, #tpu.memory_space<vmem>>, vector<1x8x32xf32>,
      %c0_39 = arith.constant 0 : index
      %c0_40 = arith.constant 0 : index
      %c0_41 = arith.constant 0 : index
      %54 = vector.load %arg8[%c0_39, %c0_40, %c0_41] : memref<4x8x1xf32, #tpu.memory_space<vmem>>, vector<1x8x1xf32>
      %55 = vector.shape_cast %54 : vector<1x8x1xf32> to vector<8x1xf32>
      %56 = vector.shape_cast %26 : vector<8x1xf32> to vector<1x8x1xf32>
      tpu.vector_store %arg8[%c0_39, %c0_40, %c0_41], %56 {strides = array<i32>} : memref<4x8x1xf32, #tpu.memory_space<vmem>>, vector<1x8x1xf32>,
      %c0_42 = arith.constant 0 : index
      %c0_43 = arith.constant 0 : index
      %c32 = arith.constant 32 : index
      %57 = vector.load %arg3[%c0_42, %c0_43, %c32] : memref<1x8x128xf32, #tpu.memory_space<vmem>>, vector<1x8x32xf32>
      %58 = vector.shape_cast %57 : vector<1x8x32xf32> to vector<8x32xf32>
      %cst_44 = arith.constant 0.176776692 : f32
      %59 = vector.broadcast %cst_44 : f32 to vector<8x32xf32>
      %60 = arith.mulf %58, %59 : vector<8x32xf32>
      %c0_45 = arith.constant 0 : index
      %c0_46 = arith.constant 0 : index
      %c32_47 = arith.constant 32 : index
      %61 = vector.load %arg4[%c0_45, %c0_46, %c32_47] : memref<1x8x128xf32, #tpu.memory_space<vmem>>, vector<1x8x32xf32>
      %62 = vector.shape_cast %61 : vector<1x8x32xf32> to vector<8x32xf32>
      %c0_48 = arith.constant 0 : index
      %c0_49 = arith.constant 0 : index
      %c32_50 = arith.constant 32 : index
      %63 = vector.load %arg5[%c0_48, %c0_49, %c32_50] : memref<1x8x128xf32, #tpu.memory_space<vmem>>, vector<1x8x32xf32>
      %64 = vector.shape_cast %63 : vector<1x8x32xf32> to vector<8x32xf32>
      %cst_51 = arith.constant dense<0.000000e+00> : vector<8x8xf32>
      %65 = tpu.matmul %60, %62, %cst_51 {dimension_numbers = #tpu.dot_dimension_numbers<[1], [1], [0], [0], [0, 0, 1, 0], [], []>} : vector<8x32xf32>, vector<8x32xf32>, vector<8x8xf32> -> vector<8x8xf32>
      %c0_52 = arith.constant 0 : index
      %c1 = arith.constant 1 : index
      %c0_53 = arith.constant 0 : index
      %c0_54 = arith.constant 0 : index
      %66 = vector.load %arg6[%c0_52, %c1, %c0_53, %c0_54] : memref<1x4x8x8xbf16, #tpu.memory_space<vmem>>, vector<1x1x8x8xbf16>
      %67 = vector.shape_cast %66 : vector<1x1x8x8xbf16> to vector<8x8xbf16>
      %68 = arith.extf %67 : vector<8x8xbf16> to vector<8x8xf32>
      %69 = arith.addf %65, %68 : vector<8x8xf32>
      %cst_55 = arith.constant dense<0xFF800000> : vector<8xf32>
      %70 = vector.multi_reduction <maximumf>, %69, %cst_55 [1] : vector<8x8xf32> to vector<8xf32>
      %71 = vector.shape_cast %70 : vector<8xf32> to vector<8x1xf32>
      %c1_56 = arith.constant 1 : index
      %c0_57 = arith.constant 0 : index
      %c0_58 = arith.constant 0 : index
      %72 = vector.load %arg8[%c1_56, %c0_57, %c0_58] : memref<4x8x1xf32, #tpu.memory_space<vmem>>, vector<1x8x1xf32>
      %73 = vector.shape_cast %72 : vector<1x8x1xf32> to vector<8x1xf32>
      %74 = arith.maximumf %73, %71 : vector<8x1xf32>
      %75 = vector.broadcast %cst_2 : f32 to vector<8x1xf32>
      %76 = arith.cmpf oeq, %74, %75 : vector<8x1xf32>
      %cst_59 = arith.constant 0.000000e+00 : f32
      %77 = vector.broadcast %cst_59 : f32 to vector<8x1xf32>
      %78 = arith.select %76, %77, %74 : vector<8x1xi1>, vector<8x1xf32>
      %79 = arith.subf %73, %78 : vector<8x1xf32>
      %80 = math.exp %79 : vector<8x1xf32>
      %81 = vector.broadcast %78 : vector<8x1xf32> to vector<8x8xf32>
      %82 = arith.subf %69, %81 : vector<8x8xf32>
      %83 = math.exp %82 : vector<8x8xf32>
      %c1_60 = arith.constant 1 : index
      %c0_61 = arith.constant 0 : index
      %c0_62 = arith.constant 0 : index
      %84 = vector.load %arg9[%c1_60, %c0_61, %c0_62] : memref<4x8x1xf32, #tpu.memory_space<vmem>>, vector<1x8x1xf32>
      %85 = vector.shape_cast %84 : vector<1x8x1xf32> to vector<8x1xf32>
      %86 = arith.mulf %80, %85 : vector<8x1xf32>
      %cst_63 = arith.constant dense<0.000000e+00> : vector<8xf32>
      %87 = vector.multi_reduction <add>, %83, %cst_63 [1] : vector<8x8xf32> to vector<8xf32>
      %88 = vector.shape_cast %87 : vector<8xf32> to vector<8x1xf32>
      %89 = arith.addf %86, %88 : vector<8x1xf32>
      %c1_64 = arith.constant 1 : index
      %c0_65 = arith.constant 0 : index
      %c0_66 = arith.constant 0 : index
      %90 = vector.load %arg9[%c1_64, %c0_65, %c0_66] : memref<4x8x1xf32, #tpu.memory_space<vmem>>, vector<1x8x1xf32>
      %91 = vector.shape_cast %90 : vector<1x8x1xf32> to vector<8x1xf32>
      %92 = vector.shape_cast %89 : vector<8x1xf32> to vector<1x8x1xf32>
      tpu.vector_store %arg9[%c1_64, %c0_65, %c0_66], %92 {strides = array<i32>} : memref<4x8x1xf32, #tpu.memory_space<vmem>>, vector<1x8x1xf32>,
      %c1_67 = arith.constant 1 : index
      %c0_68 = arith.constant 0 : index
      %c0_69 = arith.constant 0 : index
      %93 = vector.load %arg10[%c1_67, %c0_68, %c0_69] : memref<4x8x32xf32, #tpu.memory_space<vmem>>, vector<1x8x32xf32>
      %94 = vector.shape_cast %93 : vector<1x8x32xf32> to vector<8x32xf32>
      %95 = vector.broadcast %80 : vector<8x1xf32> to vector<8x32xf32>
      %96 = arith.mulf %95, %94 : vector<8x32xf32>
      %cst_70 = arith.constant dense<0.000000e+00> : vector<8x32xf32>
      %97 = tpu.matmul %83, %64, %cst_70 {dimension_numbers = #tpu.dot_dimension_numbers<[1], [0], [0], [1], [0, 0, 1, 1], [], []>} : vector<8x8xf32>, vector<8x32xf32>, vector<8x32xf32> -> vector<8x32xf32>
      %98 = arith.addf %96, %97 : vector<8x32xf32>
      %c1_71 = arith.constant 1 : index
      %c0_72 = arith.constant 0 : index
      %c0_73 = arith.constant 0 : index
      %99 = vector.load %arg10[%c1_71, %c0_72, %c0_73] : memref<4x8x32xf32, #tpu.memory_space<vmem>>, vector<1x8x32xf32>
      %100 = vector.shape_cast %99 : vector<1x8x32xf32> to vector<8x32xf32>
      %101 = vector.shape_cast %98 : vector<8x32xf32> to vector<1x8x32xf32>
      tpu.vector_store %arg10[%c1_71, %c0_72, %c0_73], %101 {strides = array<i32>} : memref<4x8x32xf32, #tpu.memory_space<vmem>>, vector<1x8x32xf32>,
      %c1_74 = arith.constant 1 : index
      %c0_75 = arith.constant 0 : index
      %c0_76 = arith.constant 0 : index
      %102 = vector.load %arg8[%c1_74, %c0_75, %c0_76] : memref<4x8x1xf32, #tpu.memory_space<vmem>>, vector<1x8x1xf32>
      %103 = vector.shape_cast %102 : vector<1x8x1xf32> to vector<8x1xf32>
      %104 = vector.shape_cast %74 : vector<8x1xf32> to vector<1x8x1xf32>
      tpu.vector_store %arg8[%c1_74, %c0_75, %c0_76], %104 {strides = array<i32>} : memref<4x8x1xf32, #tpu.memory_space<vmem>>, vector<1x8x1xf32>,
      %c0_77 = arith.constant 0 : index
      %c0_78 = arith.constant 0 : index
      %c64 = arith.constant 64 : index
      %105 = vector.load %arg3[%c0_77, %c0_78, %c64] : memref<1x8x128xf32, #tpu.memory_space<vmem>>, vector<1x8x32xf32>
      %106 = vector.shape_cast %105 : vector<1x8x32xf32> to vector<8x32xf32>
      %cst_79 = arith.constant 0.176776692 : f32
      %107 = vector.broadcast %cst_79 : f32 to vector<8x32xf32>
      %108 = arith.mulf %106, %107 : vector<8x32xf32>
      %c0_80 = arith.constant 0 : index
      %c0_81 = arith.constant 0 : index
      %c64_82 = arith.constant 64 : index
      %109 = vector.load %arg4[%c0_80, %c0_81, %c64_82] : memref<1x8x128xf32, #tpu.memory_space<vmem>>, vector<1x8x32xf32>
      %110 = vector.shape_cast %109 : vector<1x8x32xf32> to vector<8x32xf32>
      %c0_83 = arith.constant 0 : index
      %c0_84 = arith.constant 0 : index
      %c64_85 = arith.constant 64 : index
      %111 = vector.load %arg5[%c0_83, %c0_84, %c64_85] : memref<1x8x128xf32, #tpu.memory_space<vmem>>, vector<1x8x32xf32>
      %112 = vector.shape_cast %111 : vector<1x8x32xf32> to vector<8x32xf32>
      %cst_86 = arith.constant dense<0.000000e+00> : vector<8x8xf32>
      %113 = tpu.matmul %108, %110, %cst_86 {dimension_numbers = #tpu.dot_dimension_numbers<[1], [1], [0], [0], [0, 0, 1, 0], [], []>} : vector<8x32xf32>, vector<8x32xf32>, vector<8x8xf32> -> vector<8x8xf32>
      %c0_87 = arith.constant 0 : index
      %c2 = arith.constant 2 : index
      %c0_88 = arith.constant 0 : index
      %c0_89 = arith.constant 0 : index
      %114 = vector.load %arg6[%c0_87, %c2, %c0_88, %c0_89] : memref<1x4x8x8xbf16, #tpu.memory_space<vmem>>, vector<1x1x8x8xbf16>
      %115 = vector.shape_cast %114 : vector<1x1x8x8xbf16> to vector<8x8xbf16>
      %116 = arith.extf %115 : vector<8x8xbf16> to vector<8x8xf32>
      %117 = arith.addf %113, %116 : vector<8x8xf32>
      %cst_90 = arith.constant dense<0xFF800000> : vector<8xf32>
      %118 = vector.multi_reduction <maximumf>, %117, %cst_90 [1] : vector<8x8xf32> to vector<8xf32>
      %119 = vector.shape_cast %118 : vector<8xf32> to vector<8x1xf32>
      %c2_91 = arith.constant 2 : index
      %c0_92 = arith.constant 0 : index
      %c0_93 = arith.constant 0 : index
      %120 = vector.load %arg8[%c2_91, %c0_92, %c0_93] : memref<4x8x1xf32, #tpu.memory_space<vmem>>, vector<1x8x1xf32>
      %121 = vector.shape_cast %120 : vector<1x8x1xf32> to vector<8x1xf32>
      %122 = arith.maximumf %121, %119 : vector<8x1xf32>
      %123 = vector.broadcast %cst_2 : f32 to vector<8x1xf32>
      %124 = arith.cmpf oeq, %122, %123 : vector<8x1xf32>
      %cst_94 = arith.constant 0.000000e+00 : f32
      %125 = vector.broadcast %cst_94 : f32 to vector<8x1xf32>
      %126 = arith.select %124, %125, %122 : vector<8x1xi1>, vector<8x1xf32>
      %127 = arith.subf %121, %126 : vector<8x1xf32>
      %128 = math.exp %127 : vector<8x1xf32>
      %129 = vector.broadcast %126 : vector<8x1xf32> to vector<8x8xf32>
      %130 = arith.subf %117, %129 : vector<8x8xf32>
      %131 = math.exp %130 : vector<8x8xf32>
      %c2_95 = arith.constant 2 : index
      %c0_96 = arith.constant 0 : index
      %c0_97 = arith.constant 0 : index
      %132 = vector.load %arg9[%c2_95, %c0_96, %c0_97] : memref<4x8x1xf32, #tpu.memory_space<vmem>>, vector<1x8x1xf32>
      %133 = vector.shape_cast %132 : vector<1x8x1xf32> to vector<8x1xf32>
      %134 = arith.mulf %128, %133 : vector<8x1xf32>
      %cst_98 = arith.constant dense<0.000000e+00> : vector<8xf32>
      %135 = vector.multi_reduction <add>, %131, %cst_98 [1] : vector<8x8xf32> to vector<8xf32>
      %136 = vector.shape_cast %135 : vector<8xf32> to vector<8x1xf32>
      %137 = arith.addf %134, %136 : vector<8x1xf32>
      %c2_99 = arith.constant 2 : index
      %c0_100 = arith.constant 0 : index
      %c0_101 = arith.constant 0 : index
      %138 = vector.load %arg9[%c2_99, %c0_100, %c0_101] : memref<4x8x1xf32, #tpu.memory_space<vmem>>, vector<1x8x1xf32>
      %139 = vector.shape_cast %138 : vector<1x8x1xf32> to vector<8x1xf32>
      %140 = vector.shape_cast %137 : vector<8x1xf32> to vector<1x8x1xf32>
      tpu.vector_store %arg9[%c2_99, %c0_100, %c0_101], %140 {strides = array<i32>} : memref<4x8x1xf32, #tpu.memory_space<vmem>>, vector<1x8x1xf32>,
      %c2_102 = arith.constant 2 : index
      %c0_103 = arith.constant 0 : index
      %c0_104 = arith.constant 0 : index
      %141 = vector.load %arg10[%c2_102, %c0_103, %c0_104] : memref<4x8x32xf32, #tpu.memory_space<vmem>>, vector<1x8x32xf32>
      %142 = vector.shape_cast %141 : vector<1x8x32xf32> to vector<8x32xf32>
      %143 = vector.broadcast %128 : vector<8x1xf32> to vector<8x32xf32>
      %144 = arith.mulf %143, %142 : vector<8x32xf32>
      %cst_105 = arith.constant dense<0.000000e+00> : vector<8x32xf32>
      %145 = tpu.matmul %131, %112, %cst_105 {dimension_numbers = #tpu.dot_dimension_numbers<[1], [0], [0], [1], [0, 0, 1, 1], [], []>} : vector<8x8xf32>, vector<8x32xf32>, vector<8x32xf32> -> vector<8x32xf32>
      %146 = arith.addf %144, %145 : vector<8x32xf32>
      %c2_106 = arith.constant 2 : index
      %c0_107 = arith.constant 0 : index
      %c0_108 = arith.constant 0 : index
      %147 = vector.load %arg10[%c2_106, %c0_107, %c0_108] : memref<4x8x32xf32, #tpu.memory_space<vmem>>, vector<1x8x32xf32>
      %148 = vector.shape_cast %147 : vector<1x8x32xf32> to vector<8x32xf32>
      %149 = vector.shape_cast %146 : vector<8x32xf32> to vector<1x8x32xf32>
      tpu.vector_store %arg10[%c2_106, %c0_107, %c0_108], %149 {strides = array<i32>} : memref<4x8x32xf32, #tpu.memory_space<vmem>>, vector<1x8x32xf32>,
      %c2_109 = arith.constant 2 : index
      %c0_110 = arith.constant 0 : index
      %c0_111 = arith.constant 0 : index
      %150 = vector.load %arg8[%c2_109, %c0_110, %c0_111] : memref<4x8x1xf32, #tpu.memory_space<vmem>>, vector<1x8x1xf32>
      %151 = vector.shape_cast %150 : vector<1x8x1xf32> to vector<8x1xf32>
      %152 = vector.shape_cast %122 : vector<8x1xf32> to vector<1x8x1xf32>
      tpu.vector_store %arg8[%c2_109, %c0_110, %c0_111], %152 {strides = array<i32>} : memref<4x8x1xf32, #tpu.memory_space<vmem>>, vector<1x8x1xf32>,
      %c0_112 = arith.constant 0 : index
      %c0_113 = arith.constant 0 : index
      %c96 = arith.constant 96 : index
      %153 = vector.load %arg3[%c0_112, %c0_113, %c96] : memref<1x8x128xf32, #tpu.memory_space<vmem>>, vector<1x8x32xf32>
      %154 = vector.shape_cast %153 : vector<1x8x32xf32> to vector<8x32xf32>
      %cst_114 = arith.constant 0.176776692 : f32
      %155 = vector.broadcast %cst_114 : f32 to vector<8x32xf32>
      %156 = arith.mulf %154, %155 : vector<8x32xf32>
      %c0_115 = arith.constant 0 : index
      %c0_116 = arith.constant 0 : index
      %c96_117 = arith.constant 96 : index
      %157 = vector.load %arg4[%c0_115, %c0_116, %c96_117] : memref<1x8x128xf32, #tpu.memory_space<vmem>>, vector<1x8x32xf32>
      %158 = vector.shape_cast %157 : vector<1x8x32xf32> to vector<8x32xf32>
      %c0_118 = arith.constant 0 : index
      %c0_119 = arith.constant 0 : index
      %c96_120 = arith.constant 96 : index
      %159 = vector.load %arg5[%c0_118, %c0_119, %c96_120] : memref<1x8x128xf32, #tpu.memory_space<vmem>>, vector<1x8x32xf32>
      %160 = vector.shape_cast %159 : vector<1x8x32xf32> to vector<8x32xf32>
      %cst_121 = arith.constant dense<0.000000e+00> : vector<8x8xf32>
      %161 = tpu.matmul %156, %158, %cst_121 {dimension_numbers = #tpu.dot_dimension_numbers<[1], [1], [0], [0], [0, 0, 1, 0], [], []>} : vector<8x32xf32>, vector<8x32xf32>, vector<8x8xf32> -> vector<8x8xf32>
      %c0_122 = arith.constant 0 : index
      %c3 = arith.constant 3 : index
      %c0_123 = arith.constant 0 : index
      %c0_124 = arith.constant 0 : index
      %162 = vector.load %arg6[%c0_122, %c3, %c0_123, %c0_124] : memref<1x4x8x8xbf16, #tpu.memory_space<vmem>>, vector<1x1x8x8xbf16>
      %163 = vector.shape_cast %162 : vector<1x1x8x8xbf16> to vector<8x8xbf16>
      %164 = arith.extf %163 : vector<8x8xbf16> to vector<8x8xf32>
      %165 = arith.addf %161, %164 : vector<8x8xf32>
      %cst_125 = arith.constant dense<0xFF800000> : vector<8xf32>
      %166 = vector.multi_reduction <maximumf>, %165, %cst_125 [1] : vector<8x8xf32> to vector<8xf32>
      %167 = vector.shape_cast %166 : vector<8xf32> to vector<8x1xf32>
      %c3_126 = arith.constant 3 : index
      %c0_127 = arith.constant 0 : index
      %c0_128 = arith.constant 0 : index
      %168 = vector.load %arg8[%c3_126, %c0_127, %c0_128] : memref<4x8x1xf32, #tpu.memory_space<vmem>>, vector<1x8x1xf32>
      %169 = vector.shape_cast %168 : vector<1x8x1xf32> to vector<8x1xf32>
      %170 = arith.maximumf %169, %167 : vector<8x1xf32>
      %171 = vector.broadcast %cst_2 : f32 to vector<8x1xf32>
      %172 = arith.cmpf oeq, %170, %171 : vector<8x1xf32>
      %cst_129 = arith.constant 0.000000e+00 : f32
      %173 = vector.broadcast %cst_129 : f32 to vector<8x1xf32>
      %174 = arith.select %172, %173, %170 : vector<8x1xi1>, vector<8x1xf32>
      %175 = arith.subf %169, %174 : vector<8x1xf32>
      %176 = math.exp %175 : vector<8x1xf32>
      %177 = vector.broadcast %174 : vector<8x1xf32> to vector<8x8xf32>
      %178 = arith.subf %165, %177 : vector<8x8xf32>
      %179 = math.exp %178 : vector<8x8xf32>
      %c3_130 = arith.constant 3 : index
      %c0_131 = arith.constant 0 : index
      %c0_132 = arith.constant 0 : index
      %180 = vector.load %arg9[%c3_130, %c0_131, %c0_132] : memref<4x8x1xf32, #tpu.memory_space<vmem>>, vector<1x8x1xf32>
      %181 = vector.shape_cast %180 : vector<1x8x1xf32> to vector<8x1xf32>
      %182 = arith.mulf %176, %181 : vector<8x1xf32>
      %cst_133 = arith.constant dense<0.000000e+00> : vector<8xf32>
      %183 = vector.multi_reduction <add>, %179, %cst_133 [1] : vector<8x8xf32> to vector<8xf32>
      %184 = vector.shape_cast %183 : vector<8xf32> to vector<8x1xf32>
      %185 = arith.addf %182, %184 : vector<8x1xf32>
      %c3_134 = arith.constant 3 : index
      %c0_135 = arith.constant 0 : index
      %c0_136 = arith.constant 0 : index
      %186 = vector.load %arg9[%c3_134, %c0_135, %c0_136] : memref<4x8x1xf32, #tpu.memory_space<vmem>>, vector<1x8x1xf32>
      %187 = vector.shape_cast %186 : vector<1x8x1xf32> to vector<8x1xf32>
      %188 = vector.shape_cast %185 : vector<8x1xf32> to vector<1x8x1xf32>
      tpu.vector_store %arg9[%c3_134, %c0_135, %c0_136], %188 {strides = array<i32>} : memref<4x8x1xf32, #tpu.memory_space<vmem>>, vector<1x8x1xf32>,
      %c3_137 = arith.constant 3 : index
      %c0_138 = arith.constant 0 : index
      %c0_139 = arith.constant 0 : index
      %189 = vector.load %arg10[%c3_137, %c0_138, %c0_139] : memref<4x8x32xf32, #tpu.memory_space<vmem>>, vector<1x8x32xf32>
      %190 = vector.shape_cast %189 : vector<1x8x32xf32> to vector<8x32xf32>
      %191 = vector.broadcast %176 : vector<8x1xf32> to vector<8x32xf32>
      %192 = arith.mulf %191, %190 : vector<8x32xf32>
      %cst_140 = arith.constant dense<0.000000e+00> : vector<8x32xf32>
      %193 = tpu.matmul %179, %160, %cst_140 {dimension_numbers = #tpu.dot_dimension_numbers<[1], [0], [0], [1], [0, 0, 1, 1], [], []>} : vector<8x8xf32>, vector<8x32xf32>, vector<8x32xf32> -> vector<8x32xf32>
      %194 = arith.addf %192, %193 : vector<8x32xf32>
      %c3_141 = arith.constant 3 : index
      %c0_142 = arith.constant 0 : index
      %c0_143 = arith.constant 0 : index
      %195 = vector.load %arg10[%c3_141, %c0_142, %c0_143] : memref<4x8x32xf32, #tpu.memory_space<vmem>>, vector<1x8x32xf32>
      %196 = vector.shape_cast %195 : vector<1x8x32xf32> to vector<8x32xf32>
      %197 = vector.shape_cast %194 : vector<8x32xf32> to vector<1x8x32xf32>
      tpu.vector_store %arg10[%c3_141, %c0_142, %c0_143], %197 {strides = array<i32>} : memref<4x8x32xf32, #tpu.memory_space<vmem>>, vector<1x8x32xf32>,
      %c3_144 = arith.constant 3 : index
      %c0_145 = arith.constant 0 : index
      %c0_146 = arith.constant 0 : index
      %198 = vector.load %arg8[%c3_144, %c0_145, %c0_146] : memref<4x8x1xf32, #tpu.memory_space<vmem>>, vector<1x8x1xf32>
      %199 = vector.shape_cast %198 : vector<1x8x1xf32> to vector<8x1xf32>
      %200 = vector.shape_cast %170 : vector<8x1xf32> to vector<1x8x1xf32>
      tpu.vector_store %arg8[%c3_144, %c0_145, %c0_146], %200 {strides = array<i32>} : memref<4x8x1xf32, #tpu.memory_space<vmem>>, vector<1x8x1xf32>,
    } else {
    }
    %c0_i32_4 = arith.constant 0 : i32
    %6 = arith.cmpi eq, %arg2, %c0_i32_4 : i32
    %7 = arith.extui %6 : i1 to i32
    %c0_i32_5 = arith.constant 0 : i32
    %8 = arith.cmpi ne, %7, %c0_i32_5 : i32
    scf.if %8 {
      %c0 = arith.constant 0 : index
      %c0_6 = arith.constant 0 : index
      %c0_7 = arith.constant 0 : index
      %9 = vector.load %arg9[%c0, %c0_6, %c0_7] : memref<4x8x1xf32, #tpu.memory_space<vmem>>, vector<1x8x1xf32>
      %10 = vector.shape_cast %9 : vector<1x8x1xf32> to vector<8x1xf32>
      %11 = tpu.reciprocal %10 : vector<8x1xf32> -> vector<8x1xf32>
      %c0_8 = arith.constant 0 : index
      %c0_9 = arith.constant 0 : index
      %c0_10 = arith.constant 0 : index
      %12 = vector.load %arg10[%c0_8, %c0_9, %c0_10] : memref<4x8x32xf32, #tpu.memory_space<vmem>>, vector<1x8x32xf32>
      %13 = vector.shape_cast %12 : vector<1x8x32xf32> to vector<8x32xf32>
      %14 = vector.broadcast %11 : vector<8x1xf32> to vector<8x32xf32>
      %15 = arith.mulf %13, %14 : vector<8x32xf32>
      %c1 = arith.constant 1 : index
      %c0_11 = arith.constant 0 : index
      %c0_12 = arith.constant 0 : index
      %16 = vector.load %arg9[%c1, %c0_11, %c0_12] : memref<4x8x1xf32, #tpu.memory_space<vmem>>, vector<1x8x1xf32>
      %17 = vector.shape_cast %16 : vector<1x8x1xf32> to vector<8x1xf32>
      %18 = tpu.reciprocal %17 : vector<8x1xf32> -> vector<8x1xf32>
      %c1_13 = arith.constant 1 : index
      %c0_14 = arith.constant 0 : index
      %c0_15 = arith.constant 0 : index
      %19 = vector.load %arg10[%c1_13, %c0_14, %c0_15] : memref<4x8x32xf32, #tpu.memory_space<vmem>>, vector<1x8x32xf32>
      %20 = vector.shape_cast %19 : vector<1x8x32xf32> to vector<8x32xf32>
      %21 = vector.broadcast %18 : vector<8x1xf32> to vector<8x32xf32>
      %22 = arith.mulf %20, %21 : vector<8x32xf32>
      %c2 = arith.constant 2 : index
      %c0_16 = arith.constant 0 : index
      %c0_17 = arith.constant 0 : index
      %23 = vector.load %arg9[%c2, %c0_16, %c0_17] : memref<4x8x1xf32, #tpu.memory_space<vmem>>, vector<1x8x1xf32>
      %24 = vector.shape_cast %23 : vector<1x8x1xf32> to vector<8x1xf32>
      %25 = tpu.reciprocal %24 : vector<8x1xf32> -> vector<8x1xf32>
      %c2_18 = arith.constant 2 : index
      %c0_19 = arith.constant 0 : index
      %c0_20 = arith.constant 0 : index
      %26 = vector.load %arg10[%c2_18, %c0_19, %c0_20] : memref<4x8x32xf32, #tpu.memory_space<vmem>>, vector<1x8x32xf32>
      %27 = vector.shape_cast %26 : vector<1x8x32xf32> to vector<8x32xf32>
      %28 = vector.broadcast %25 : vector<8x1xf32> to vector<8x32xf32>
      %29 = arith.mulf %27, %28 : vector<8x32xf32>
      %c3 = arith.constant 3 : index
      %c0_21 = arith.constant 0 : index
      %c0_22 = arith.constant 0 : index
      %30 = vector.load %arg9[%c3, %c0_21, %c0_22] : memref<4x8x1xf32, #tpu.memory_space<vmem>>, vector<1x8x1xf32>
      %31 = vector.shape_cast %30 : vector<1x8x1xf32> to vector<8x1xf32>
      %32 = tpu.reciprocal %31 : vector<8x1xf32> -> vector<8x1xf32>
      %c3_23 = arith.constant 3 : index
      %c0_24 = arith.constant 0 : index
      %c0_25 = arith.constant 0 : index
      %33 = vector.load %arg10[%c3_23, %c0_24, %c0_25] : memref<4x8x32xf32, #tpu.memory_space<vmem>>, vector<1x8x32xf32>
      %34 = vector.shape_cast %33 : vector<1x8x32xf32> to vector<8x32xf32>
      %35 = vector.broadcast %32 : vector<8x1xf32> to vector<8x32xf32>
      %36 = arith.mulf %34, %35 : vector<8x32xf32>
      %37 = tpu.concatenate %15, %22, %29, %36 in 1 : vector<8x32xf32>, vector<8x32xf32>, vector<8x32xf32>, vector<8x32xf32> -> vector<8x128xf32>
      %c0_26 = arith.constant 0 : index
      %c0_27 = arith.constant 0 : index
      %c0_28 = arith.constant 0 : index
      %38 = vector.load %arg7[%c0_26, %c0_27, %c0_28] : memref<1x8x128xf32, #tpu.memory_space<vmem>>, vector<1x8x128xf32>
      %39 = vector.shape_cast %38 : vector<1x8x128xf32> to vector<8x128xf32>
      %40 = vector.shape_cast %37 : vector<8x128xf32> to vector<1x8x128xf32>
      tpu.vector_store %arg7[%c0_26, %c0_27, %c0_28], %40 {strides = array<i32>} : memref<1x8x128xf32, #tpu.memory_space<vmem>>, vector<1x8x128xf32>,
    } else {
    }
    return
  }
  func.func @transform_0(%arg0: i32, %arg1: i32, %arg2: i32) -> (i32, i32, i32) {
    %c0_i32 = arith.constant 0 : i32
    %c0_i32_0 = arith.constant 0 : i32
    return %arg0, %arg1, %c0_i32 : i32, i32, i32
  }
  func.func @transform_1(%arg0: i32, %arg1: i32, %arg2: i32) -> (i32, i32, i32) {
    %c0_i32 = arith.constant 0 : i32
    %c0_i32_0 = arith.constant 0 : i32
    return %arg0, %arg2, %c0_i32 : i32, i32, i32
  }
  func.func @transform_2(%arg0: i32, %arg1: i32, %arg2: i32) -> (i32, i32, i32) {
    %c0_i32 = arith.constant 0 : i32
    %c0_i32_0 = arith.constant 0 : i32
    return %arg0, %arg2, %c0_i32 : i32, i32, i32
  }
  func.func @transform_3(%arg0: i32, %arg1: i32, %arg2: i32) -> (i32, i32, i32, i32) {
    %c0_i32 = arith.constant 0 : i32
    %c0_i32_0 = arith.constant 0 : i32
    return %arg0, %c0_i32, %arg1, %arg2 : i32, i32, i32, i32
  }
  func.func @transform_4(%arg0: i32, %arg1: i32, %arg2: i32) -> (i32, i32, i32) {
    %c0_i32 = arith.constant 0 : i32
    %c0_i32_0 = arith.constant 0 : i32
    return %arg0, %arg1, %c0_i32 : i32, i32, i32
  }
}

</mosaic_0001>

<llo_original>
// kernel: tpu_custom_call.1
$region0: #{tpu_custom_call.1}
  #allocation0 [shape = 'u32[]', space=smem, size = 0x4, offset = 0x4, fixed_abs, tag = 'smem constant byte address 0x4 - core index']
  #allocation1 [shape = 'u32[144,128]{1,0:T(1,128)}', space=vmem, size = 0x12000, scoped, tag = 'internal scratch']
  #allocation2 [shape = 'f32[4,8,1]{2,1,0:T(8,128)}', space=vmem, size = 0x4000, scoped, tag = 'scratch operand']
  #allocation3 [shape = 'f32[4,8,1]{2,1,0:T(8,128)}', space=vmem, size = 0x4000, scoped, tag = 'scratch operand']
  #allocation4 [shape = 'f32[4,8,32]{2,1,0:T(8,128)}', space=vmem, size = 0x4000, scoped, tag = 'scratch operand']
  %s0 = inlined_call_operand.hbm [shape: f32[2,8,128], index: 0, kind: input, shape index: {}]
  %s1 = inlined_call_operand.hbm [shape: f32[2,8,128], index: 1, kind: input, shape index: {}]
  %s2 = inlined_call_operand.hbm [shape: f32[2,8,128], index: 2, kind: input, shape index: {}]
  %s3 = inlined_call_operand.hbm [shape: bf16[2,4,8,8], index: 3, kind: input, shape index: {}]
  %s4 = inlined_call_operand.hbm [shape: f32[2,8,128], index: 4, kind: output, shape index: {}]
  %s5 = sld [smem:[#allocation0]]
  $region77: #{tpu_custom_call.1} parent=0
    _
  %s7 = ssub.s32 1, %s5
  %s8 = scalar_select 0, %s7, %s5
  $region1: #{tpu_custom_call.1} parent=0
    #allocation5 [shape = 'u8[8192]{0}', space=vmem, size = 0x2000, scoped, tag = 'input window, operand 0']
    #allocation6 [shape = 's32[2]{0}', space=sflag, size = 0x8, scoped, tag = 'scoped memory for tpu_custom_call.1']
    #allocation7 [shape = 's32[2]{0}', space=sflag, size = 0x8, scoped, tag = 'scoped memory for tpu_custom_call.1']
    #allocation8 [shape = 'u8[8192]{0}', space=vmem, size = 0x2000, scoped, tag = 'input window, operand 1']
    #allocation9 [shape = 's32[2]{0}', space=sflag, size = 0x8, scoped, tag = 'scoped memory for tpu_custom_call.1']
    #allocation10 [shape = 'u8[8192]{0}', space=vmem, size = 0x2000, scoped, tag = 'input window, operand 2']
    #allocation11 [shape = 'u8[16384]{0}', space=vmem, size = 0x4000, scoped, tag = 'input window, operand 3']
    #allocation12 [shape = 's32[2]{0}', space=sflag, size = 0x8, scoped, tag = 'scoped memory for tpu_custom_call.1']
    #allocation13 [shape = 'u8[8192]{0}', space=vmem, size = 0x2000, scoped, tag = 'output window, operand 0']
    %9 = vsyncpa [#allocation6], 0
    %s10 = scalar_lea.sflag [#allocation6], 1
    %11 = vsyncpa %s10, 0
    %12 = vsyncpa [#allocation9], 0
    %s13 = scalar_lea.sflag [#allocation9], 1
    %14 = vsyncpa %s13, 0
    %15 = vsyncpa [#allocation12], 0
    %s16 = scalar_lea.sflag [#allocation12], 1
    %17 = vsyncpa %s16, 0
    %18 = vsyncpa [#allocation7], 0
    %s19 = scalar_lea.sflag [#allocation7], 1
    %20 = vsyncpa %s19, 0
    loop: start=0, step=1, limit=4
    $region2: #{tpu_custom_call.1} parent=1 // loop_pre_header
      _
    $region3: #{tpu_custom_call.1} parent=1 // loop_header
      %s22 = sphi 0, %s26
      %p23 = scmp.ge.s32.totalorder %s22, 4
      %s29 = sphi 0, %s48
      %s30 = sphi 0, %s44
      %s31 = sphi 0, %s40
      %s32 = sphi 0, %s29
      %s33 = sphi 0, %s30
      %s34 = sphi 0, %s31
      %s35 = sphi 0, %s32
      %s36 = sphi 0, %s33
      %s37 = sphi 0, %s34
      %s53 = sphi 0, %s55
      %s56 = sphi 0, %s53
      %s57 = sphi 0, %s56
      %s73 = sphi 0, %s57
      %s81 = sphi 0, %s83
      %s84 = sphi 0, %s81
      %s85 = sphi 0, %s84
      %s101 = sphi 0, %s85
      %s109 = sphi 0, %s111
      %s112 = sphi 0, %s109
      %s113 = sphi 0, %s112
      %s129 = sphi 0, %s113
      %s139 = sphi 0, %s141
      %s142 = sphi 0, %s139
      %s143 = sphi 0, %s142
      %s159 = sphi 0, %s143
      %s167 = sphi 0, %s169
      %s170 = sphi 0, %s167
      %s171 = sphi 0, %s170
      %s187 = sphi 0, %s171
    $region4: #{tpu_custom_call.1} parent=1 // loop_header_branch
      %25 = sbr.rel (%p23) target = $region8
    $region5: #{tpu_custom_call.1} parent=1 // loop_body
      %s27 = ssub.s32 %s22, 1
      %s28 = ssub.s32 %s22, 2
      %s38 = sadd.s32 1, %s31
      %p39 = scmp.ge.s32.totalorder %s38, 1
      %s40 = scalar_select %p39, 0, %s38
      %s41 = sadd.s32 1, %s30
      %s42 = scalar_select %p39, %s41, %s30
      %p43 = scmp.ge.s32.totalorder %s42, 1
      %s44 = scalar_select %p43, 0, %s42
      %s45 = sadd.s32 1, %s29
      %s46 = scalar_select %p43, %s45, %s29
      %p47 = scmp.ge.s32.totalorder %s46, 2
      %s48 = scalar_select %p47, 0, %s46
      %s49 = ssub.s32 %s29, %s48
      %s50 = ssub.s32 %s30, %s44
      %s51 = sor.u32 %s49, %s50
      %p52 = scmp.eq.s32.totalorder %s51, 0
      %s54 = sadd.s32 %s53, 1
      %s55 = scalar_select %p52, %s53, %s54
      %p58 = pneg %p52
      %p59 = scmp.eq.s32.totalorder %s22, 1
      %p60 = por %p58, %p59
      %p61 = scmp.ne.s32.totalorder %s53, %s56
      %p62 = scmp.eq.s32.totalorder %s22, 0
      %p63 = por %p61, %p62
      %p64 = scmp.ne.s32.totalorder %s53, %s56
      %p65 = scmp.eq.s32.totalorder %s27, 1
      %p66 = por %p64, %p65
      %p67 = scmp.ne.s32.totalorder %s56, %s57
      %p68 = scmp.eq.s32.totalorder %s27, 0
      %p69 = por %p67, %p68
      %p70 = scmp.ne.s32.totalorder %s56, %s57
      %p71 = scmp.eq.s32.totalorder %s28, 1
      %p72 = por %p70, %p71
      %p74 = scmp.ne.s32.totalorder %s57, %s73
      %p75 = scmp.eq.s32.totalorder %s28, 0
      %p76 = por %p74, %p75
      %s77 = ssub.s32 %s29, %s48
      %s78 = ssub.s32 %s31, %s40
      %s79 = sor.u32 %s77, %s78
      %p80 = scmp.eq.s32.totalorder %s79, 0
      %s82 = sadd.s32 %s81, 1
      %s83 = scalar_select %p80, %s81, %s82
      %p86 = pneg %p80
      %p87 = scmp.eq.s32.totalorder %s22, 1
      %p88 = por %p86, %p87
      %p89 = scmp.ne.s32.totalorder %s81, %s84
      %p90 = scmp.eq.s32.totalorder %s22, 0
      %p91 = por %p89, %p90
      %p92 = scmp.ne.s32.totalorder %s81, %s84
      %p93 = scmp.eq.s32.totalorder %s27, 1
      %p94 = por %p92, %p93
      %p95 = scmp.ne.s32.totalorder %s84, %s85
      %p96 = scmp.eq.s32.totalorder %s27, 0
      %p97 = por %p95, %p96
      %p98 = scmp.ne.s32.totalorder %s84, %s85
      %p99 = scmp.eq.s32.totalorder %s28, 1
      %p100 = por %p98, %p99
      %p102 = scmp.ne.s32.totalorder %s85, %s101
      %p103 = scmp.eq.s32.totalorder %s28, 0
      %p104 = por %p102, %p103
      %s105 = ssub.s32 %s29, %s48
      %s106 = ssub.s32 %s31, %s40
      %s107 = sor.u32 %s105, %s106
      %p108 = scmp.eq.s32.totalorder %s107, 0
      %s110 = sadd.s32 %s109, 1
      %s111 = scalar_select %p108, %s109, %s110
      %p114 = pneg %p108
      %p115 = scmp.eq.s32.totalorder %s22, 1
      %p116 = por %p114, %p115
      %p117 = scmp.ne.s32.totalorder %s109, %s112
      %p118 = scmp.eq.s32.totalorder %s22, 0
      %p119 = por %p117, %p118
      %p120 = scmp.ne.s32.totalorder %s109, %s112
      %p121 = scmp.eq.s32.totalorder %s27, 1
      %p122 = por %p120, %p121
      %p123 = scmp.ne.s32.totalorder %s112, %s113
      %p124 = scmp.eq.s32.totalorder %s27, 0
      %p125 = por %p123, %p124
      %p126 = scmp.ne.s32.totalorder %s112, %s113
      %p127 = scmp.eq.s32.totalorder %s28, 1
      %p128 = por %p126, %p127
      %p130 = scmp.ne.s32.totalorder %s113, %s129
      %p131 = scmp.eq.s32.totalorder %s28, 0
      %p132 = por %p130, %p131
      %s133 = ssub.s32 %s29, %s48
      %s134 = ssub.s32 %s30, %s44
      %s135 = sor.u32 %s133, %s134
      %s136 = ssub.s32 %s31, %s40
      %s137 = sor.u32 %s135, %s136
      %p138 = scmp.eq.s32.totalorder %s137, 0
      %s140 = sadd.s32 %s139, 1
      %s141 = scalar_select %p138, %s139, %s140
      %p144 = pneg %p138
      %p145 = scmp.eq.s32.totalorder %s22, 1
      %p146 = por %p144, %p145
      %p147 = scmp.ne.s32.totalorder %s139, %s142
      %p148 = scmp.eq.s32.totalorder %s22, 0
      %p149 = por %p147, %p148
      %p150 = scmp.ne.s32.totalorder %s139, %s142
      %p151 = scmp.eq.s32.totalorder %s27, 1
      %p152 = por %p150, %p151
      %p153 = scmp.ne.s32.totalorder %s142, %s143
      %p154 = scmp.eq.s32.totalorder %s27, 0
      %p155 = por %p153, %p154
      %p156 = scmp.ne.s32.totalorder %s142, %s143
      %p157 = scmp.eq.s32.totalorder %s28, 1
      %p158 = por %p156, %p157
      %p160 = scmp.ne.s32.totalorder %s143, %s159
      %p161 = scmp.eq.s32.totalorder %s28, 0
      %p162 = por %p160, %p161
      %s163 = ssub.s32 %s29, %s48
      %s164 = ssub.s32 %s30, %s44
      %s165 = sor.u32 %s163, %s164
      %p166 = scmp.eq.s32.totalorder %s165, 0
      %s168 = sadd.s32 %s167, 1
      %s169 = scalar_select %p166, %s167, %s168
      %p172 = pneg %p166
      %p173 = scmp.eq.s32.totalorder %s22, 1
      %p174 = por %p172, %p173
      %p175 = scmp.ne.s32.totalorder %s167, %s170
      %p176 = scmp.eq.s32.totalorder %s22, 0
      %p177 = por %p175, %p176
      %p178 = scmp.ne.s32.totalorder %s167, %s170
      %p179 = scmp.eq.s32.totalorder %s27, 1
      %p180 = por %p178, %p179
      %p181 = scmp.ne.s32.totalorder %s170, %s171
      %p182 = scmp.eq.s32.totalorder %s27, 0
      %p183 = por %p181, %p182
      %p184 = scmp.ne.s32.totalorder %s170, %s171
      %p185 = scmp.eq.s32.totalorder %s28, 1
      %p186 = por %p184, %p185
      %p188 = scmp.ne.s32.totalorder %s171, %s187
      %p189 = scmp.eq.s32.totalorder %s28, 0
      %p190 = por %p188, %p189
      %p191 = scmp.le.s32.totalorder 1, %s22
      %p192 = scmp.lt.s32.totalorder %s22, 3
      %p193 = pnand %p191, %p192
      %p194 = pneg %p193
      // Predicated region
      $region9: #{tpu_custom_call.1} parent=5 // pred_check
        _
      $region10: #{tpu_custom_call.1} parent=5 // pred_check_branch
        %196 = sbr.rel (%p193) target = $region12
      $region11: #{tpu_custom_call.1} parent=5 // pred_region
        %s197 = ssub.s32 %s22, 1
      $region12: #{tpu_custom_call.1} parent=5 // pred_fallthru
        _
      %p198 = scmp.lt.s32.totalorder %s22, 2
      // Predicated region
      $region13: #{tpu_custom_call.1} parent=5 // pred_check
        %p199 = pneg %p198
      $region14: #{tpu_custom_call.1} parent=5 // pred_check_branch
        %201 = sbr.rel (%p199) target = $region16
      $region15: #{tpu_custom_call.1} parent=5 // pred_region
        // Predicated region
        $region17: #{tpu_custom_call.1} parent=15 // pred_check
          %p202 = pneg %p63
        $region18: #{tpu_custom_call.1} parent=15 // pred_check_branch
          %204 = sbr.rel (%p202) target = $region20
        $region19: #{tpu_custom_call.1} parent=15 // pred_region
          %s205 = sand.u32 %s53, 1
          %s206 = scalar_lea.sflag [#allocation6], %s205
          %s207 = sand.u32 %s53, 1
          %s208 = smul.addr %s207, 8
          %s209 = scalar_lea.vmem [#allocation5], %s208
          %s211 = ssub.s32 128, 128
          %212 = vsyncadd %s206, %s211
          %s213 = sadd.s32 %s30, %s29
          %s214 = smul.addr %s213, 128
          %s215 = scalar_lea.hbm %s0, %s214
          %s217 = sshll.u32 %s209, 4
          %s218 = int_to_ptr.vmem [resolvable:$true] %s217
          %220 = dma.hbm_to_vmem [thread:$0]  %s215, 128, %s218, %s206
        $region20: #{tpu_custom_call.1} parent=15 // pred_fallthru
          _
        // Predicated region
        $region21: #{tpu_custom_call.1} parent=15 // pred_check
          %p221 = pneg %p91
        $region22: #{tpu_custom_call.1} parent=15 // pred_check_branch
          %223 = sbr.rel (%p221) target = $region24
        $region23: #{tpu_custom_call.1} parent=15 // pred_region
          %s224 = sand.u32 %s22, 1
          %s225 = scalar_lea.sflag [#allocation9], %s224
          %s226 = sand.u32 %s81, 1
          %s227 = smul.addr %s226, 8
          %s228 = scalar_lea.vmem [#allocation8], %s227
          %s230 = ssub.s32 128, 128
          %231 = vsyncadd %s225, %s230
          %s232 = sadd.s32 %s31, %s29
          %s233 = smul.addr %s232, 128
          %s234 = scalar_lea.hbm %s1, %s233
          %s236 = sshll.u32 %s228, 4
          %s237 = int_to_ptr.vmem [resolvable:$true] %s236
          %239 = dma.hbm_to_vmem [thread:$0]  %s234, 128, %s237, %s225
        $region24: #{tpu_custom_call.1} parent=15 // pred_fallthru
          _
        // Predicated region
        $region25: #{tpu_custom_call.1} parent=15 // pred_check
          %p240 = pneg %p119
        $region26: #{tpu_custom_call.1} parent=15 // pred_check_branch
          %242 = sbr.rel (%p240) target = $region28
        $region27: #{tpu_custom_call.1} parent=15 // pred_region
          %s243 = sand.u32 %s22, 1
          %s244 = scalar_lea.sflag [#allocation9], %s243
          %s245 = sand.u32 %s109, 1
          %s246 = smul.addr %s245, 8
          %s247 = scalar_lea.vmem [#allocation10], %s246
          %s249 = ssub.s32 128, 128
          %250 = vsyncadd %s244, %s249
          %s251 = sadd.s32 %s31, %s29
          %s252 = smul.addr %s251, 128
          %s253 = scalar_lea.hbm %s2, %s252
          %s255 = sshll.u32 %s247, 4
          %s256 = int_to_ptr.vmem [resolvable:$true] %s255
          %258 = dma.hbm_to_vmem [thread:$0]  %s253, 128, %s256, %s244
        $region28: #{tpu_custom_call.1} parent=15 // pred_fallthru
          _
        // Predicated region
        $region29: #{tpu_custom_call.1} parent=15 // pred_check
          %p259 = pneg %p149
        $region30: #{tpu_custom_call.1} parent=15 // pred_check_branch
          %261 = sbr.rel (%p259) target = $region32
        $region31: #{tpu_custom_call.1} parent=15 // pred_region
          %s262 = sand.u32 %s139, 1
          %s263 = scalar_lea.sflag [#allocation12], %s262
          %s264 = sand.u32 %s139, 1
          %s265 = smul.addr %s264, 16
          %s266 = scalar_lea.vmem [#allocation11], %s265
          %s268 = ssub.s32 256, 256
          %269 = vsyncadd %s263, %s268
          %s270 = sadd.s32 %s31, %s30
          %s271 = smul.addr %s29, 4
          %s272 = sadd.s32 %s270, %s271
          %s273 = smul.addr %s272, 64
          %s274 = scalar_lea.hbm %s3, %s273
          %s275 = sshll.u32 %s266, 4
          %s276 = int_to_ptr.vmem [resolvable:$true] %s275
          %281 = dma.hbm_to_vmem [thread:$0]  %s274, 256, %s276, %s263, 64, 64, 4
        $region32: #{tpu_custom_call.1} parent=15 // pred_fallthru
          _
      $region16: #{tpu_custom_call.1} parent=5 // pred_fallthru
        _
      %p282 = scmp.le.s32.totalorder 1, %s22
      %p283 = scmp.lt.s32.totalorder %s22, 3
      %p284 = pnand %p282, %p283
      %p285 = pneg %p284
      // Predicated region
      $region33: #{tpu_custom_call.1} parent=5 // pred_check
        _
      $region34: #{tpu_custom_call.1} parent=5 // pred_check_branch
        %287 = sbr.rel (%p284) target = $region36
      $region35: #{tpu_custom_call.1} parent=5 // pred_region
        %s288 = ssub.s32 %s22, 1
        %s289 = sand.u32 %s56, 1
        %s290 = scalar_lea.sflag [#allocation6], %s289
        %s291 = sand.u32 %s56, 1
        %s292 = smul.addr %s291, 8
        %s293 = scalar_lea.vmem [#allocation5], %s292
        // Predicated region
        $region37: #{tpu_custom_call.1} parent=35 // pred_check
          %p294 = pneg %p69
        $region38: #{tpu_custom_call.1} parent=35 // pred_check_branch
          %296 = sbr.rel (%p294) target = $region40
        $region39: #{tpu_custom_call.1} parent=35 // pred_region
          %297 = dma.done %s290, 128
        $region40: #{tpu_custom_call.1} parent=35 // pred_fallthru
          _
        %s298 = sand.u32 %s27, 1
        %s299 = scalar_lea.sflag [#allocation9], %s298
        %s300 = sand.u32 %s84, 1
        %s301 = smul.addr %s300, 8
        %s302 = scalar_lea.vmem [#allocation8], %s301
        // Predicated region
        $region41: #{tpu_custom_call.1} parent=35 // pred_check
          %p303 = pneg %p97
        $region42: #{tpu_custom_call.1} parent=35 // pred_check_branch
          %305 = sbr.rel (%p303) target = $region44
        $region43: #{tpu_custom_call.1} parent=35 // pred_region
          %306 = dma.done %s299, 128
        $region44: #{tpu_custom_call.1} parent=35 // pred_fallthru
          _
        %s307 = sand.u32 %s27, 1
        %s308 = scalar_lea.sflag [#allocation9], %s307
        %s309 = sand.u32 %s112, 1
        %s310 = smul.addr %s309, 8
        %s311 = scalar_lea.vmem [#allocation10], %s310
        // Predicated region
        $region45: #{tpu_custom_call.1} parent=35 // pred_check
          %p312 = pneg %p125
        $region46: #{tpu_custom_call.1} parent=35 // pred_check_branch
          %314 = sbr.rel (%p312) target = $region48
        $region47: #{tpu_custom_call.1} parent=35 // pred_region
          %315 = dma.done %s308, 128
        $region48: #{tpu_custom_call.1} parent=35 // pred_fallthru
          _
        %s316 = sand.u32 %s142, 1
        %s317 = scalar_lea.sflag [#allocation12], %s316
        %s318 = sand.u32 %s142, 1
        %s319 = smul.addr %s318, 16
        %s320 = scalar_lea.vmem [#allocation11], %s319
        // Predicated region
        $region49: #{tpu_custom_call.1} parent=35 // pred_check
          %p321 = pneg %p155
        $region50: #{tpu_custom_call.1} parent=35 // pred_check_branch
          %323 = sbr.rel (%p321) target = $region52
        $region51: #{tpu_custom_call.1} parent=35 // pred_region
          %324 = dma.done %s317, 256
        $region52: #{tpu_custom_call.1} parent=35 // pred_fallthru
          _
        %s325 = sand.u32 %s56, 1
        %s326 = scalar_lea.sflag [#allocation6], %s325
        %s327 = sand.u32 %s56, 1
        %s328 = smul.addr %s327, 8
        %s329 = scalar_lea.vmem [#allocation5], %s328
        %p330 = pneg %p69
        %p331 = pneg %p66
        %s332 = sand.u32 %s27, 1
        %s333 = scalar_lea.sflag [#allocation9], %s332
        %s334 = sand.u32 %s84, 1
        %s335 = smul.addr %s334, 8
        %s336 = scalar_lea.vmem [#allocation8], %s335
        %p337 = pneg %p97
        %p338 = pneg %p94
        %s339 = sand.u32 %s27, 1
        %s340 = scalar_lea.sflag [#allocation9], %s339
        %s341 = sand.u32 %s112, 1
        %s342 = smul.addr %s341, 8
        %s343 = scalar_lea.vmem [#allocation10], %s342
        %p344 = pneg %p125
        %p345 = pneg %p122
        %s346 = sand.u32 %s142, 1
        %s347 = scalar_lea.sflag [#allocation12], %s346
        %s348 = sand.u32 %s142, 1
        %s349 = smul.addr %s348, 16
        %s350 = scalar_lea.vmem [#allocation11], %s349
        %p351 = pneg %p155
        %p352 = pneg %p152
        %p353 = pneg %p183
        %p354 = pneg %p180
        %s355 = sand.u32 %s170, 1
        %s356 = scalar_lea.sflag [#allocation7], %s355
        %s357 = sand.u32 %s170, 1
        %s358 = smul.addr %s357, 8
        %s359 = scalar_lea.vmem [#allocation13], %s358
        %p360 = scmp.eq.s32.totalorder %s34, 0
        // Predicated region
        $region53: #{tpu_custom_call.1} parent=35 // pred_check
          %p361 = pneg %p360
        $region54: #{tpu_custom_call.1} parent=35 // pred_check_branch
          %363 = sbr.rel (%p361) target = $region56
        $region55: #{tpu_custom_call.1} parent=35 // pred_region
          %v364 = vld [vmem:[%s293] sm:$0xff]
          %v365 = vmul.f32 %v364, 0.17677669
          %v366 = vld [vmem:[%s302] sm:$0xff]
          %v367 = vld [vmem:[%s311] sm:$0xff]
          %v368 = vld [vmem:[%s320] sm:$0xf]
          %v369 = vunpack.c.l.bf16 %v368
          %vm370 = vcmask 261120
          %v372 = vsel %vm370, %v365, 0
          %v375 = vsel %vm370, %v366, 0
          %377 = vmatprep.subr.mxu0 0.0
          %378 = vmatpush1.xpose.msra.mxu0 %v375
          %379 = vmatprep.subr.mxu0 0.0
          %380 = vmatpush1.xpose.msra.mxu0 0.0
          %381 = vmatprep.subr.mxu0 0.0
          %382 = vmatpush1.xpose.msra.mxu0 0.0
          %383 = vmatprep.subr.mxu0 0.0
          %384 = vmatpush1.xpose.msra.mxu0 0.0
          %385 = vmatprep.subr.mxu0 0.0
          %386 = vmatpush1.xpose.msra.mxu0 0.0
          %387 = vmatprep.subr.mxu0 0.0
          %388 = vmatpush1.xpose.msra.mxu0 0.0
          %389 = vmatprep.subr.mxu0 0.0
          %390 = vmatpush1.xpose.msra.mxu0 0.0
          %391 = vmatprep.subr.mxu0 0.0
          %392 = vmatpush1.xpose.msra.mxu0 0.0
          %393 = vmatprep.subr.mxu0 0.0
          %394 = vmatpush1.xpose.msra.mxu0 0.0
          %395 = vmatprep.subr.mxu0 0.0
          %396 = vmatpush1.xpose.msra.mxu0 0.0
          %397 = vmatprep.subr.mxu0 0.0
          %398 = vmatpush1.xpose.msra.mxu0 0.0
          %399 = vmatprep.subr.mxu0 0.0
          %400 = vmatpush1.xpose.msra.mxu0 0.0
          %401 = vmatprep.subr.mxu0 0.0
          %402 = vmatpush1.xpose.msra.mxu0 0.0
          %403 = vmatprep.subr.mxu0 0.0
          %404 = vmatpush1.xpose.msra.mxu0 0.0
          %405 = vmatprep.subr.mxu0 0.0
          %406 = vmatpush1.xpose.msra.mxu0 0.0
          %407 = vmatprep.subr.mxu0 0.0
          %408 = vmatpush1.xpose.msra.mxu0 0.0
          %409 = vmatprep.subr.mxu0 0.0
          %410 = vmatpush1.xpose.msra.mxu0 0.0
          %411 = vmatprep.subr.mxu0 0.0
          %412 = vmatpush1.xpose.msra.mxu0 0.0
          %413 = vmatprep.subr.mxu0 0.0
          %414 = vmatpush1.xpose.msra.mxu0 0.0
          %415 = vmatprep.subr.mxu0 0.0
          %416 = vmatpush1.xpose.msra.mxu0 0.0
          %417 = vmatprep.subr.mxu0 0.0
          %418 = vmatpush1.xpose.msra.mxu0 0.0
          %419 = vmatprep.subr.mxu0 0.0
          %420 = vmatpush1.xpose.msra.mxu0 0.0
          %421 = vmatprep.subr.mxu0 0.0
          %422 = vmatpush1.xpose.msra.mxu0 0.0
          %423 = vmatprep.subr.mxu0 0.0
          %424 = vmatpush1.xpose.msra.mxu0 0.0
          %425 = vmatprep.subr.mxu0 0.0
          %426 = vmatpush1.xpose.msra.mxu0 0.0
          %427 = vmatprep.subr.mxu0 0.0
          %428 = vmatpush1.xpose.msra.mxu0 0.0
          %429 = vmatprep.subr.mxu0 0.0
          %430 = vmatpush1.xpose.msra.mxu0 0.0
          %431 = vmatprep.subr.mxu0 0.0
          %432 = vmatpush1.xpose.msra.mxu0 0.0
          %433 = vmatprep.subr.mxu0 0.0
          %434 = vmatpush1.xpose.msra.mxu0 0.0
          %435 = vmatprep.subr.mxu0 0.0
          %436 = vmatpush1.xpose.msra.mxu0 0.0
          %437 = vmatprep.subr.mxu0 0.0
          %438 = vmatpush1.xpose.msra.mxu0 0.0
          %439 = vmatprep.subr.mxu0 0.0
          %440 = vmatpush1.xpose.msra.mxu0 0.0
          %441 = vmatprep.mubr.f32.mxu0 0.0
          %442 = vmatmul.mubr.f32.gmra.mrb[0].mxu0 %v372
          %v443 = vpop.f32.mrb[0].mxu0
          %v444 = vadd.f32 %v369, %v443
          %v445 = vpop.f32.mrb[0].mxu0
          %446 = vdwg.mxu0
          %vm447 = vcmask 64512
          %v448 = vsel %vm447, %v444, -inf
          %449 = vmax.xlane.f32.xlu0 %v448
          %v450 = vpop.xlane.xlu0 %449
          %vm451 = vcmp.eq.f32.partialorder %v450, -inf
          %v452 = vsel %vm451, 0.0, %v450
          %v453 = vsub.f32 %v444, %v452
          %v454 = vmul.f32 %v453, 1.442695
          %v455 = vpow.pop %v454
          %v456 = vsel %vm447, %v455, 0.0
          %457 = vadd.xlane.f32.xlu0 %v456
          %v458 = vpop.xlane.xlu0 %457
          %vm459 = vcmask 7168
          %460 = vst.msk [vmem:[#allocation3] sm:$0xff] %vm459, %v458
          %v462 = vsel %vm447, %v455, 0
          %464 = vmatprep.subr.mxu0 0.0
          %465 = vmatpush1.msra.mxu0 %v367
          %466 = vmatprep.subr.mxu0 0.0
          %467 = vmatpush1.msra.mxu0 0.0
          %468 = vmatprep.subr.mxu0 0.0
          %469 = vmatpush1.msra.mxu0 0.0
          %470 = vmatprep.subr.mxu0 0.0
          %471 = vmatpush1.msra.mxu0 0.0
          %472 = vmatprep.subr.mxu0 0.0
          %473 = vmatpush1.msra.mxu0 0.0
          %474 = vmatprep.subr.mxu0 0.0
          %475 = vmatpush1.msra.mxu0 0.0
          %476 = vmatprep.subr.mxu0 0.0
          %477 = vmatpush1.msra.mxu0 0.0
          %478 = vmatprep.subr.mxu0 0.0
          %479 = vmatpush1.msra.mxu0 0.0
          %480 = vmatprep.subr.mxu0 0.0
          %481 = vmatpush1.msra.mxu0 0.0
          %482 = vmatprep.subr.mxu0 0.0
          %483 = vmatpush1.msra.mxu0 0.0
          %484 = vmatprep.subr.mxu0 0.0
          %485 = vmatpush1.msra.mxu0 0.0
          %486 = vmatprep.subr.mxu0 0.0
          %487 = vmatpush1.msra.mxu0 0.0
          %488 = vmatprep.subr.mxu0 0.0
          %489 = vmatpush1.msra.mxu0 0.0
          %490 = vmatprep.subr.mxu0 0.0
          %491 = vmatpush1.msra.mxu0 0.0
          %492 = vmatprep.subr.mxu0 0.0
          %493 = vmatpush1.msra.mxu0 0.0
          %494 = vmatprep.subr.mxu0 0.0
          %495 = vmatpush1.msra.mxu0 0.0
          %496 = vmatprep.subr.mxu0 0.0
          %497 = vmatpush1.msra.mxu0 0.0
          %498 = vmatprep.subr.mxu0 0.0
          %499 = vmatpush1.msra.mxu0 0.0
          %500 = vmatprep.subr.mxu0 0.0
          %501 = vmatpush1.msra.mxu0 0.0
          %502 = vmatprep.subr.mxu0 0.0
          %503 = vmatpush1.msra.mxu0 0.0
          %504 = vmatprep.subr.mxu0 0.0
          %505 = vmatpush1.msra.mxu0 0.0
          %506 = vmatprep.subr.mxu0 0.0
          %507 = vmatpush1.msra.mxu0 0.0
          %508 = vmatprep.subr.mxu0 0.0
          %509 = vmatpush1.msra.mxu0 0.0
          %510 = vmatprep.subr.mxu0 0.0
          %511 = vmatpush1.msra.mxu0 0.0
          %512 = vmatprep.subr.mxu0 0.0
          %513 = vmatpush1.msra.mxu0 0.0
          %514 = vmatprep.subr.mxu0 0.0
          %515 = vmatpush1.msra.mxu0 0.0
          %516 = vmatprep.subr.mxu0 0.0
          %517 = vmatpush1.msra.mxu0 0.0
          %518 = vmatprep.subr.mxu0 0.0
          %519 = vmatpush1.msra.mxu0 0.0
          %520 = vmatprep.subr.mxu0 0.0
          %521 = vmatpush1.msra.mxu0 0.0
          %522 = vmatprep.subr.mxu0 0.0
          %523 = vmatpush1.msra.mxu0 0.0
          %524 = vmatprep.subr.mxu0 0.0
          %525 = vmatpush1.msra.mxu0 0.0
          %526 = vmatprep.subr.mxu0 0.0
          %527 = vmatpush1.msra.mxu0 0.0
          %528 = vmatprep.mubr.f32.mxu0 0.0
          %529 = vmatmul.mubr.f32.gmra.mrb[0].mxu0 %v462
          %v530 = vpop.f32.mrb[0].mxu0
          %v531 = vadd.f32 0.0, %v530
          %v532 = vpop.f32.mrb[0].mxu0
          %533 = vdwg.mxu0
          %534 = vst.msk [vmem:[#allocation4] sm:$0xff] %vm370, %v531
          %535 = vst.msk [vmem:[#allocation2] sm:$0xff] %vm459, %v450
          %v536 = vld [vmem:[%s293] sm:$0xff]
          %v537 = vmul.f32 %v536, 0.17677669
          %v538 = vld [vmem:[%s302] sm:$0xff]
          %v539 = vld [vmem:[%s311] sm:$0xff]
          %s540 = scalar_lea.vmem %s320, 4 [#allocation11]
          %v541 = vld [vmem:[%s540] sm:$0xf]
          %v542 = vunpack.c.l.bf16 %v541
          %544 = vrot.lane.b32.xlu0 %v537, 96
          %v545 = vpop.permute.xlu0 %544
          %547 = vrot.lane.b32.xlu0 %v538, 96
          %v548 = vpop.permute.xlu0 %547
          %v549 = vsel %vm370, %v545, 0
          %v551 = vsel %vm370, %v548, 0
          %553 = vmatprep.subr.mxu0 0.0
          %554 = vmatpush1.xpose.msra.mxu0 %v551
          %555 = vmatprep.subr.mxu0 0.0
          %556 = vmatpush1.xpose.msra.mxu0 0.0
          %557 = vmatprep.subr.mxu0 0.0
          %558 = vmatpush1.xpose.msra.mxu0 0.0
          %559 = vmatprep.subr.mxu0 0.0
          %560 = vmatpush1.xpose.msra.mxu0 0.0
          %561 = vmatprep.subr.mxu0 0.0
          %562 = vmatpush1.xpose.msra.mxu0 0.0
          %563 = vmatprep.subr.mxu0 0.0
          %564 = vmatpush1.xpose.msra.mxu0 0.0
          %565 = vmatprep.subr.mxu0 0.0
          %566 = vmatpush1.xpose.msra.mxu0 0.0
          %567 = vmatprep.subr.mxu0 0.0
          %568 = vmatpush1.xpose.msra.mxu0 0.0
          %569 = vmatprep.subr.mxu0 0.0
          %570 = vmatpush1.xpose.msra.mxu0 0.0
          %571 = vmatprep.subr.mxu0 0.0
          %572 = vmatpush1.xpose.msra.mxu0 0.0
          %573 = vmatprep.subr.mxu0 0.0
          %574 = vmatpush1.xpose.msra.mxu0 0.0
          %575 = vmatprep.subr.mxu0 0.0
          %576 = vmatpush1.xpose.msra.mxu0 0.0
          %577 = vmatprep.subr.mxu0 0.0
          %578 = vmatpush1.xpose.msra.mxu0 0.0
          %579 = vmatprep.subr.mxu0 0.0
          %580 = vmatpush1.xpose.msra.mxu0 0.0
          %581 = vmatprep.subr.mxu0 0.0
          %582 = vmatpush1.xpose.msra.mxu0 0.0
          %583 = vmatprep.subr.mxu0 0.0
          %584 = vmatpush1.xpose.msra.mxu0 0.0
          %585 = vmatprep.subr.mxu0 0.0
          %586 = vmatpush1.xpose.msra.mxu0 0.0
          %587 = vmatprep.subr.mxu0 0.0
          %588 = vmatpush1.xpose.msra.mxu0 0.0
          %589 = vmatprep.subr.mxu0 0.0
          %590 = vmatpush1.xpose.msra.mxu0 0.0
          %591 = vmatprep.subr.mxu0 0.0
          %592 = vmatpush1.xpose.msra.mxu0 0.0
          %593 = vmatprep.subr.mxu0 0.0
          %594 = vmatpush1.xpose.msra.mxu0 0.0
          %595 = vmatprep.subr.mxu0 0.0
          %596 = vmatpush1.xpose.msra.mxu0 0.0
          %597 = vmatprep.subr.mxu0 0.0
          %598 = vmatpush1.xpose.msra.mxu0 0.0
          %599 = vmatprep.subr.mxu0 0.0
          %600 = vmatpush1.xpose.msra.mxu0 0.0
          %601 = vmatprep.subr.mxu0 0.0
          %602 = vmatpush1.xpose.msra.mxu0 0.0
          %603 = vmatprep.subr.mxu0 0.0
          %604 = vmatpush1.xpose.msra.mxu0 0.0
          %605 = vmatprep.subr.mxu0 0.0
          %606 = vmatpush1.xpose.msra.mxu0 0.0
          %607 = vmatprep.subr.mxu0 0.0
          %608 = vmatpush1.xpose.msra.mxu0 0.0
          %609 = vmatprep.subr.mxu0 0.0
          %610 = vmatpush1.xpose.msra.mxu0 0.0
          %611 = vmatprep.subr.mxu0 0.0
          %612 = vmatpush1.xpose.msra.mxu0 0.0
          %613 = vmatprep.subr.mxu0 0.0
          %614 = vmatpush1.xpose.msra.mxu0 0.0
          %615 = vmatprep.subr.mxu0 0.0
          %616 = vmatpush1.xpose.msra.mxu0 0.0
          %617 = vmatprep.mubr.f32.mxu0 0.0
          %618 = vmatmul.mubr.f32.gmra.mrb[0].mxu0 %v549
          %v619 = vpop.f32.mrb[0].mxu0
          %v620 = vadd.f32 %v542, %v619
          %v621 = vpop.f32.mrb[0].mxu0
          %622 = vdwg.mxu0
          %v623 = vsel %vm447, %v620, -inf
          %624 = vmax.xlane.f32.xlu0 %v623
          %v625 = vpop.xlane.xlu0 %624
          %vm626 = vcmp.eq.f32.partialorder %v625, -inf
          %v627 = vsel %vm626, 0.0, %v625
          %v628 = vsub.f32 %v620, %v627
          %v629 = vmul.f32 %v628, 1.442695
          %v630 = vpow.pop %v629
          %v631 = vsel %vm447, %v630, 0.0
          %632 = vadd.xlane.f32.xlu0 %v631
          %v633 = vpop.xlane.xlu0 %632
          %s634 = scalar_lea.vmem [#allocation3], 8
          %635 = vst.msk [vmem:[%s634] sm:$0xff] %vm459, %v633
          %637 = vrot.lane.b32.xlu0 %v539, 96
          %v638 = vpop.permute.xlu0 %637
          %v641 = vsel %vm447, %v630, 0
          %643 = vmatprep.subr.mxu0 0.0
          %644 = vmatpush1.msra.mxu0 %v638
          %645 = vmatprep.subr.mxu0 0.0
          %646 = vmatpush1.msra.mxu0 0.0
          %647 = vmatprep.subr.mxu0 0.0
          %648 = vmatpush1.msra.mxu0 0.0
          %649 = vmatprep.subr.mxu0 0.0
          %650 = vmatpush1.msra.mxu0 0.0
          %651 = vmatprep.subr.mxu0 0.0
          %652 = vmatpush1.msra.mxu0 0.0
          %653 = vmatprep.subr.mxu0 0.0
          %654 = vmatpush1.msra.mxu0 0.0
          %655 = vmatprep.subr.mxu0 0.0
          %656 = vmatpush1.msra.mxu0 0.0
          %657 = vmatprep.subr.mxu0 0.0
          %658 = vmatpush1.msra.mxu0 0.0
          %659 = vmatprep.subr.mxu0 0.0
          %660 = vmatpush1.msra.mxu0 0.0
          %661 = vmatprep.subr.mxu0 0.0
          %662 = vmatpush1.msra.mxu0 0.0
          %663 = vmatprep.subr.mxu0 0.0
          %664 = vmatpush1.msra.mxu0 0.0
          %665 = vmatprep.subr.mxu0 0.0
          %666 = vmatpush1.msra.mxu0 0.0
          %667 = vmatprep.subr.mxu0 0.0
          %668 = vmatpush1.msra.mxu0 0.0
          %669 = vmatprep.subr.mxu0 0.0
          %670 = vmatpush1.msra.mxu0 0.0
          %671 = vmatprep.subr.mxu0 0.0
          %672 = vmatpush1.msra.mxu0 0.0
          %673 = vmatprep.subr.mxu0 0.0
          %674 = vmatpush1.msra.mxu0 0.0
          %675 = vmatprep.subr.mxu0 0.0
          %676 = vmatpush1.msra.mxu0 0.0
          %677 = vmatprep.subr.mxu0 0.0
          %678 = vmatpush1.msra.mxu0 0.0
          %679 = vmatprep.subr.mxu0 0.0
          %680 = vmatpush1.msra.mxu0 0.0
          %681 = vmatprep.subr.mxu0 0.0
          %682 = vmatpush1.msra.mxu0 0.0
          %683 = vmatprep.subr.mxu0 0.0
          %684 = vmatpush1.msra.mxu0 0.0
          %685 = vmatprep.subr.mxu0 0.0
          %686 = vmatpush1.msra.mxu0 0.0
          %687 = vmatprep.subr.mxu0 0.0
          %688 = vmatpush1.msra.mxu0 0.0
          %689 = vmatprep.subr.mxu0 0.0
          %690 = vmatpush1.msra.mxu0 0.0
          %691 = vmatprep.subr.mxu0 0.0
          %692 = vmatpush1.msra.mxu0 0.0
          %693 = vmatprep.subr.mxu0 0.0
          %694 = vmatpush1.msra.mxu0 0.0
          %695 = vmatprep.subr.mxu0 0.0
          %696 = vmatpush1.msra.mxu0 0.0
          %697 = vmatprep.subr.mxu0 0.0
          %698 = vmatpush1.msra.mxu0 0.0
          %699 = vmatprep.subr.mxu0 0.0
          %700 = vmatpush1.msra.mxu0 0.0
          %701 = vmatprep.subr.mxu0 0.0
          %702 = vmatpush1.msra.mxu0 0.0
          %703 = vmatprep.subr.mxu0 0.0
          %704 = vmatpush1.msra.mxu0 0.0
          %705 = vmatprep.subr.mxu0 0.0
          %706 = vmatpush1.msra.mxu0 0.0
          %707 = vmatprep.mubr.f32.mxu0 0.0
          %708 = vmatmul.mubr.f32.gmra.mrb[0].mxu0 %v641
          %v709 = vpop.f32.mrb[0].mxu0
          %v710 = vadd.f32 0.0, %v709
          %v711 = vpop.f32.mrb[0].mxu0
          %712 = vdwg.mxu0
          %s713 = scalar_lea.vmem [#allocation4], 8
          %714 = vst.msk [vmem:[%s713] sm:$0xff] %vm370, %v710
          %s715 = scalar_lea.vmem [#allocation2], 8
          %716 = vst.msk [vmem:[%s715] sm:$0xff] %vm459, %v625
          %v717 = vld [vmem:[%s293] sm:$0xff]
          %v718 = vmul.f32 %v717, 0.17677669
          %v719 = vld [vmem:[%s302] sm:$0xff]
          %v720 = vld [vmem:[%s311] sm:$0xff]
          %s721 = scalar_lea.vmem %s320, 8 [#allocation11]
          %v722 = vld [vmem:[%s721] sm:$0xf]
          %v723 = vunpack.c.l.bf16 %v722
          %725 = vrot.lane.b32.xlu0 %v718, 64
          %v726 = vpop.permute.xlu0 %725
          %728 = vrot.lane.b32.xlu0 %v719, 64
          %v729 = vpop.permute.xlu0 %728
          %v730 = vsel %vm370, %v726, 0
          %v732 = vsel %vm370, %v729, 0
          %734 = vmatprep.subr.mxu0 0.0
          %735 = vmatpush1.xpose.msra.mxu0 %v732
          %736 = vmatprep.subr.mxu0 0.0
          %737 = vmatpush1.xpose.msra.mxu0 0.0
          %738 = vmatprep.subr.mxu0 0.0
          %739 = vmatpush1.xpose.msra.mxu0 0.0
          %740 = vmatprep.subr.mxu0 0.0
          %741 = vmatpush1.xpose.msra.mxu0 0.0
          %742 = vmatprep.subr.mxu0 0.0
          %743 = vmatpush1.xpose.msra.mxu0 0.0
          %744 = vmatprep.subr.mxu0 0.0
          %745 = vmatpush1.xpose.msra.mxu0 0.0
          %746 = vmatprep.subr.mxu0 0.0
          %747 = vmatpush1.xpose.msra.mxu0 0.0
          %748 = vmatprep.subr.mxu0 0.0
          %749 = vmatpush1.xpose.msra.mxu0 0.0
          %750 = vmatprep.subr.mxu0 0.0
          %751 = vmatpush1.xpose.msra.mxu0 0.0
          %752 = vmatprep.subr.mxu0 0.0
          %753 = vmatpush1.xpose.msra.mxu0 0.0
          %754 = vmatprep.subr.mxu0 0.0
          %755 = vmatpush1.xpose.msra.mxu0 0.0
          %756 = vmatprep.subr.mxu0 0.0
          %757 = vmatpush1.xpose.msra.mxu0 0.0
          %758 = vmatprep.subr.mxu0 0.0
          %759 = vmatpush1.xpose.msra.mxu0 0.0
          %760 = vmatprep.subr.mxu0 0.0
          %761 = vmatpush1.xpose.msra.mxu0 0.0
          %762 = vmatprep.subr.mxu0 0.0
          %763 = vmatpush1.xpose.msra.mxu0 0.0
          %764 = vmatprep.subr.mxu0 0.0
          %765 = vmatpush1.xpose.msra.mxu0 0.0
          %766 = vmatprep.subr.mxu0 0.0
          %767 = vmatpush1.xpose.msra.mxu0 0.0
          %768 = vmatprep.subr.mxu0 0.0
          %769 = vmatpush1.xpose.msra.mxu0 0.0
          %770 = vmatprep.subr.mxu0 0.0
          %771 = vmatpush1.xpose.msra.mxu0 0.0
          %772 = vmatprep.subr.mxu0 0.0
          %773 = vmatpush1.xpose.msra.mxu0 0.0
          %774 = vmatprep.subr.mxu0 0.0
          %775 = vmatpush1.xpose.msra.mxu0 0.0
          %776 = vmatprep.subr.mxu0 0.0
          %777 = vmatpush1.xpose.msra.mxu0 0.0
          %778 = vmatprep.subr.mxu0 0.0
          %779 = vmatpush1.xpose.msra.mxu0 0.0
          %780 = vmatprep.subr.mxu0 0.0
          %781 = vmatpush1.xpose.msra.mxu0 0.0
          %782 = vmatprep.subr.mxu0 0.0
          %783 = vmatpush1.xpose.msra.mxu0 0.0
          %784 = vmatprep.subr.mxu0 0.0
          %785 = vmatpush1.xpose.msra.mxu0 0.0
          %786 = vmatprep.subr.mxu0 0.0
          %787 = vmatpush1.xpose.msra.mxu0 0.0
          %788 = vmatprep.subr.mxu0 0.0
          %789 = vmatpush1.xpose.msra.mxu0 0.0
          %790 = vmatprep.subr.mxu0 0.0
          %791 = vmatpush1.xpose.msra.mxu0 0.0
          %792 = vmatprep.subr.mxu0 0.0
          %793 = vmatpush1.xpose.msra.mxu0 0.0
          %794 = vmatprep.subr.mxu0 0.0
          %795 = vmatpush1.xpose.msra.mxu0 0.0
          %796 = vmatprep.subr.mxu0 0.0
          %797 = vmatpush1.xpose.msra.mxu0 0.0
          %798 = vmatprep.mubr.f32.mxu0 0.0
          %799 = vmatmul.mubr.f32.gmra.mrb[0].mxu0 %v730
          %v800 = vpop.f32.mrb[0].mxu0
          %v801 = vadd.f32 %v723, %v800
          %v802 = vpop.f32.mrb[0].mxu0
          %803 = vdwg.mxu0
          %v804 = vsel %vm447, %v801, -inf
          %805 = vmax.xlane.f32.xlu0 %v804
          %v806 = vpop.xlane.xlu0 %805
          %vm807 = vcmp.eq.f32.partialorder %v806, -inf
          %v808 = vsel %vm807, 0.0, %v806
          %v809 = vsub.f32 %v801, %v808
          %v810 = vmul.f32 %v809, 1.442695
          %v811 = vpow.pop %v810
          %v812 = vsel %vm447, %v811, 0.0
          %813 = vadd.xlane.f32.xlu0 %v812
          %v814 = vpop.xlane.xlu0 %813
          %s815 = scalar_lea.vmem [#allocation3], 16
          %816 = vst.msk [vmem:[%s815] sm:$0xff] %vm459, %v814
          %818 = vrot.lane.b32.xlu0 %v720, 64
          %v819 = vpop.permute.xlu0 %818
          %v822 = vsel %vm447, %v811, 0
          %824 = vmatprep.subr.mxu0 0.0
          %825 = vmatpush1.msra.mxu0 %v819
          %826 = vmatprep.subr.mxu0 0.0
          %827 = vmatpush1.msra.mxu0 0.0
          %828 = vmatprep.subr.mxu0 0.0
          %829 = vmatpush1.msra.mxu0 0.0
          %830 = vmatprep.subr.mxu0 0.0
          %831 = vmatpush1.msra.mxu0 0.0
          %832 = vmatprep.subr.mxu0 0.0
          %833 = vmatpush1.msra.mxu0 0.0
          %834 = vmatprep.subr.mxu0 0.0
          %835 = vmatpush1.msra.mxu0 0.0
          %836 = vmatprep.subr.mxu0 0.0
          %837 = vmatpush1.msra.mxu0 0.0
          %838 = vmatprep.subr.mxu0 0.0
          %839 = vmatpush1.msra.mxu0 0.0
          %840 = vmatprep.subr.mxu0 0.0
          %841 = vmatpush1.msra.mxu0 0.0
          %842 = vmatprep.subr.mxu0 0.0
          %843 = vmatpush1.msra.mxu0 0.0
          %844 = vmatprep.subr.mxu0 0.0
          %845 = vmatpush1.msra.mxu0 0.0
          %846 = vmatprep.subr.mxu0 0.0
          %847 = vmatpush1.msra.mxu0 0.0
          %848 = vmatprep.subr.mxu0 0.0
          %849 = vmatpush1.msra.mxu0 0.0
          %850 = vmatprep.subr.mxu0 0.0
          %851 = vmatpush1.msra.mxu0 0.0
          %852 = vmatprep.subr.mxu0 0.0
          %853 = vmatpush1.msra.mxu0 0.0
          %854 = vmatprep.subr.mxu0 0.0
          %855 = vmatpush1.msra.mxu0 0.0
          %856 = vmatprep.subr.mxu0 0.0
          %857 = vmatpush1.msra.mxu0 0.0
          %858 = vmatprep.subr.mxu0 0.0
          %859 = vmatpush1.msra.mxu0 0.0
          %860 = vmatprep.subr.mxu0 0.0
          %861 = vmatpush1.msra.mxu0 0.0
          %862 = vmatprep.subr.mxu0 0.0
          %863 = vmatpush1.msra.mxu0 0.0
          %864 = vmatprep.subr.mxu0 0.0
          %865 = vmatpush1.msra.mxu0 0.0
          %866 = vmatprep.subr.mxu0 0.0
          %867 = vmatpush1.msra.mxu0 0.0
          %868 = vmatprep.subr.mxu0 0.0
          %869 = vmatpush1.msra.mxu0 0.0
          %870 = vmatprep.subr.mxu0 0.0
          %871 = vmatpush1.msra.mxu0 0.0
          %872 = vmatprep.subr.mxu0 0.0
          %873 = vmatpush1.msra.mxu0 0.0
          %874 = vmatprep.subr.mxu0 0.0
          %875 = vmatpush1.msra.mxu0 0.0
          %876 = vmatprep.subr.mxu0 0.0
          %877 = vmatpush1.msra.mxu0 0.0
          %878 = vmatprep.subr.mxu0 0.0
          %879 = vmatpush1.msra.mxu0 0.0
          %880 = vmatprep.subr.mxu0 0.0
          %881 = vmatpush1.msra.mxu0 0.0
          %882 = vmatprep.subr.mxu0 0.0
          %883 = vmatpush1.msra.mxu0 0.0
          %884 = vmatprep.subr.mxu0 0.0
          %885 = vmatpush1.msra.mxu0 0.0
          %886 = vmatprep.subr.mxu0 0.0
          %887 = vmatpush1.msra.mxu0 0.0
          %888 = vmatprep.mubr.f32.mxu0 0.0
          %889 = vmatmul.mubr.f32.gmra.mrb[0].mxu0 %v822
          %v890 = vpop.f32.mrb[0].mxu0
          %v891 = vadd.f32 0.0, %v890
          %v892 = vpop.f32.mrb[0].mxu0
          %893 = vdwg.mxu0
          %s894 = scalar_lea.vmem [#allocation4], 16
          %895 = vst.msk [vmem:[%s894] sm:$0xff] %vm370, %v891
          %s896 = scalar_lea.vmem [#allocation2], 16
          %897 = vst.msk [vmem:[%s896] sm:$0xff] %vm459, %v806
          %v898 = vld [vmem:[%s293] sm:$0xff]
          %v899 = vmul.f32 %v898, 0.17677669
          %v900 = vld [vmem:[%s302] sm:$0xff]
          %v901 = vld [vmem:[%s311] sm:$0xff]
          %s902 = scalar_lea.vmem %s320, 12 [#allocation11]
          %v903 = vld [vmem:[%s902] sm:$0xf]
          %v904 = vunpack.c.l.bf16 %v903
          %906 = vrot.lane.b32.xlu0 %v899, 32
          %v907 = vpop.permute.xlu0 %906
          %909 = vrot.lane.b32.xlu0 %v900, 32
          %v910 = vpop.permute.xlu0 %909
          %v911 = vsel %vm370, %v907, 0
          %v913 = vsel %vm370, %v910, 0
          %915 = vmatprep.subr.mxu0 0.0
          %916 = vmatpush1.xpose.msra.mxu0 %v913
          %917 = vmatprep.subr.mxu0 0.0
          %918 = vmatpush1.xpose.msra.mxu0 0.0
          %919 = vmatprep.subr.mxu0 0.0
          %920 = vmatpush1.xpose.msra.mxu0 0.0
          %921 = vmatprep.subr.mxu0 0.0
          %922 = vmatpush1.xpose.msra.mxu0 0.0
          %923 = vmatprep.subr.mxu0 0.0
          %924 = vmatpush1.xpose.msra.mxu0 0.0
          %925 = vmatprep.subr.mxu0 0.0
          %926 = vmatpush1.xpose.msra.mxu0 0.0
          %927 = vmatprep.subr.mxu0 0.0
          %928 = vmatpush1.xpose.msra.mxu0 0.0
          %929 = vmatprep.subr.mxu0 0.0
          %930 = vmatpush1.xpose.msra.mxu0 0.0
          %931 = vmatprep.subr.mxu0 0.0
          %932 = vmatpush1.xpose.msra.mxu0 0.0
          %933 = vmatprep.subr.mxu0 0.0
          %934 = vmatpush1.xpose.msra.mxu0 0.0
          %935 = vmatprep.subr.mxu0 0.0
          %936 = vmatpush1.xpose.msra.mxu0 0.0
          %937 = vmatprep.subr.mxu0 0.0
          %938 = vmatpush1.xpose.msra.mxu0 0.0
          %939 = vmatprep.subr.mxu0 0.0
          %940 = vmatpush1.xpose.msra.mxu0 0.0
          %941 = vmatprep.subr.mxu0 0.0
          %942 = vmatpush1.xpose.msra.mxu0 0.0
          %943 = vmatprep.subr.mxu0 0.0
          %944 = vmatpush1.xpose.msra.mxu0 0.0
          %945 = vmatprep.subr.mxu0 0.0
          %946 = vmatpush1.xpose.msra.mxu0 0.0
          %947 = vmatprep.subr.mxu0 0.0
          %948 = vmatpush1.xpose.msra.mxu0 0.0
          %949 = vmatprep.subr.mxu0 0.0
          %950 = vmatpush1.xpose.msra.mxu0 0.0
          %951 = vmatprep.subr.mxu0 0.0
          %952 = vmatpush1.xpose.msra.mxu0 0.0
          %953 = vmatprep.subr.mxu0 0.0
          %954 = vmatpush1.xpose.msra.mxu0 0.0
          %955 = vmatprep.subr.mxu0 0.0
          %956 = vmatpush1.xpose.msra.mxu0 0.0
          %957 = vmatprep.subr.mxu0 0.0
          %958 = vmatpush1.xpose.msra.mxu0 0.0
          %959 = vmatprep.subr.mxu0 0.0
          %960 = vmatpush1.xpose.msra.mxu0 0.0
          %961 = vmatprep.subr.mxu0 0.0
          %962 = vmatpush1.xpose.msra.mxu0 0.0
          %963 = vmatprep.subr.mxu0 0.0
          %964 = vmatpush1.xpose.msra.mxu0 0.0
          %965 = vmatprep.subr.mxu0 0.0
          %966 = vmatpush1.xpose.msra.mxu0 0.0
          %967 = vmatprep.subr.mxu0 0.0
          %968 = vmatpush1.xpose.msra.mxu0 0.0
          %969 = vmatprep.subr.mxu0 0.0
          %970 = vmatpush1.xpose.msra.mxu0 0.0
          %971 = vmatprep.subr.mxu0 0.0
          %972 = vmatpush1.xpose.msra.mxu0 0.0
          %973 = vmatprep.subr.mxu0 0.0
          %974 = vmatpush1.xpose.msra.mxu0 0.0
          %975 = vmatprep.subr.mxu0 0.0
          %976 = vmatpush1.xpose.msra.mxu0 0.0
          %977 = vmatprep.subr.mxu0 0.0
          %978 = vmatpush1.xpose.msra.mxu0 0.0
          %979 = vmatprep.mubr.f32.mxu0 0.0
          %980 = vmatmul.mubr.f32.gmra.mrb[0].mxu0 %v911
          %v981 = vpop.f32.mrb[0].mxu0
          %v982 = vadd.f32 %v904, %v981
          %v983 = vpop.f32.mrb[0].mxu0
          %984 = vdwg.mxu0
          %v985 = vsel %vm447, %v982, -inf
          %986 = vmax.xlane.f32.xlu0 %v985
          %v987 = vpop.xlane.xlu0 %986
          %vm988 = vcmp.eq.f32.partialorder %v987, -inf
          %v989 = vsel %vm988, 0.0, %v987
          %v990 = vsub.f32 %v982, %v989
          %v991 = vmul.f32 %v990, 1.442695
          %v992 = vpow.pop %v991
          %v993 = vsel %vm447, %v992, 0.0
          %994 = vadd.xlane.f32.xlu0 %v993
          %v995 = vpop.xlane.xlu0 %994
          %s996 = scalar_lea.vmem [#allocation3], 24
          %997 = vst.msk [vmem:[%s996] sm:$0xff] %vm459, %v995
          %999 = vrot.lane.b32.xlu0 %v901, 32
          %v1000 = vpop.permute.xlu0 %999
          %v1003 = vsel %vm447, %v992, 0
          %1005 = vmatprep.subr.mxu0 0.0
          %1006 = vmatpush1.msra.mxu0 %v1000
          %1007 = vmatprep.subr.mxu0 0.0
          %1008 = vmatpush1.msra.mxu0 0.0
          %1009 = vmatprep.subr.mxu0 0.0
          %1010 = vmatpush1.msra.mxu0 0.0
          %1011 = vmatprep.subr.mxu0 0.0
          %1012 = vmatpush1.msra.mxu0 0.0
          %1013 = vmatprep.subr.mxu0 0.0
          %1014 = vmatpush1.msra.mxu0 0.0
          %1015 = vmatprep.subr.mxu0 0.0
          %1016 = vmatpush1.msra.mxu0 0.0
          %1017 = vmatprep.subr.mxu0 0.0
          %1018 = vmatpush1.msra.mxu0 0.0
          %1019 = vmatprep.subr.mxu0 0.0
          %1020 = vmatpush1.msra.mxu0 0.0
          %1021 = vmatprep.subr.mxu0 0.0
          %1022 = vmatpush1.msra.mxu0 0.0
          %1023 = vmatprep.subr.mxu0 0.0
          %1024 = vmatpush1.msra.mxu0 0.0
          %1025 = vmatprep.subr.mxu0 0.0
          %1026 = vmatpush1.msra.mxu0 0.0
          %1027 = vmatprep.subr.mxu0 0.0
          %1028 = vmatpush1.msra.mxu0 0.0
          %1029 = vmatprep.subr.mxu0 0.0
          %1030 = vmatpush1.msra.mxu0 0.0
          %1031 = vmatprep.subr.mxu0 0.0
          %1032 = vmatpush1.msra.mxu0 0.0
          %1033 = vmatprep.subr.mxu0 0.0
          %1034 = vmatpush1.msra.mxu0 0.0
          %1035 = vmatprep.subr.mxu0 0.0
          %1036 = vmatpush1.msra.mxu0 0.0
          %1037 = vmatprep.subr.mxu0 0.0
          %1038 = vmatpush1.msra.mxu0 0.0
          %1039 = vmatprep.subr.mxu0 0.0
          %1040 = vmatpush1.msra.mxu0 0.0
          %1041 = vmatprep.subr.mxu0 0.0
          %1042 = vmatpush1.msra.mxu0 0.0
          %1043 = vmatprep.subr.mxu0 0.0
          %1044 = vmatpush1.msra.mxu0 0.0
          %1045 = vmatprep.subr.mxu0 0.0
          %1046 = vmatpush1.msra.mxu0 0.0
          %1047 = vmatprep.subr.mxu0 0.0
          %1048 = vmatpush1.msra.mxu0 0.0
          %1049 = vmatprep.subr.mxu0 0.0
          %1050 = vmatpush1.msra.mxu0 0.0
          %1051 = vmatprep.subr.mxu0 0.0
          %1052 = vmatpush1.msra.mxu0 0.0
          %1053 = vmatprep.subr.mxu0 0.0
          %1054 = vmatpush1.msra.mxu0 0.0
          %1055 = vmatprep.subr.mxu0 0.0
          %1056 = vmatpush1.msra.mxu0 0.0
          %1057 = vmatprep.subr.mxu0 0.0
          %1058 = vmatpush1.msra.mxu0 0.0
          %1059 = vmatprep.subr.mxu0 0.0
          %1060 = vmatpush1.msra.mxu0 0.0
          %1061 = vmatprep.subr.mxu0 0.0
          %1062 = vmatpush1.msra.mxu0 0.0
          %1063 = vmatprep.subr.mxu0 0.0
          %1064 = vmatpush1.msra.mxu0 0.0
          %1065 = vmatprep.subr.mxu0 0.0
          %1066 = vmatpush1.msra.mxu0 0.0
          %1067 = vmatprep.subr.mxu0 0.0
          %1068 = vmatpush1.msra.mxu0 0.0
          %1069 = vmatprep.mubr.f32.mxu0 0.0
          %1070 = vmatmul.mubr.f32.gmra.mrb[0].mxu0 %v1003
          %v1071 = vpop.f32.mrb[0].mxu0
          %v1072 = vadd.f32 0.0, %v1071
          %v1073 = vpop.f32.mrb[0].mxu0
          %1074 = vdwg.mxu0
          %s1075 = scalar_lea.vmem [#allocation4], 24
          %1076 = vst.msk [vmem:[%s1075] sm:$0xff] %vm370, %v1072
          %s1077 = scalar_lea.vmem [#allocation2], 24
          %1078 = vst.msk [vmem:[%s1077] sm:$0xff] %vm459, %v987
        $region56: #{tpu_custom_call.1} parent=35 // pred_fallthru
          _
        %p1079 = scmp.gt.s32.totalorder %s34, 0
        // Predicated region
        $region57: #{tpu_custom_call.1} parent=35 // pred_check
          %p1080 = pneg %p1079
        $region58: #{tpu_custom_call.1} parent=35 // pred_check_branch
          %1082 = sbr.rel (%p1080) target = $region60
        $region59: #{tpu_custom_call.1} parent=35 // pred_region
          %v1083 = vld [vmem:[%s293] sm:$0xff]
          %v1084 = vmul.f32 %v1083, 0.17677669
          %v1085 = vld [vmem:[%s302] sm:$0xff]
          %v1086 = vld [vmem:[%s311] sm:$0xff]
          %v1087 = vld [vmem:[%s320] sm:$0xf]
          %v1088 = vunpack.c.l.bf16 %v1087
          %vm1089 = vcmask 261120
          %v1091 = vsel %vm1089, %v1084, 0
          %v1094 = vsel %vm1089, %v1085, 0
          %1096 = vmatprep.subr.mxu0 0.0
          %1097 = vmatpush1.xpose.msra.mxu0 %v1094
          %1098 = vmatprep.subr.mxu0 0.0
          %1099 = vmatpush1.xpose.msra.mxu0 0.0
          %1100 = vmatprep.subr.mxu0 0.0
          %1101 = vmatpush1.xpose.msra.mxu0 0.0
          %1102 = vmatprep.subr.mxu0 0.0
          %1103 = vmatpush1.xpose.msra.mxu0 0.0
          %1104 = vmatprep.subr.mxu0 0.0
          %1105 = vmatpush1.xpose.msra.mxu0 0.0
          %1106 = vmatprep.subr.mxu0 0.0
          %1107 = vmatpush1.xpose.msra.mxu0 0.0
          %1108 = vmatprep.subr.mxu0 0.0
          %1109 = vmatpush1.xpose.msra.mxu0 0.0
          %1110 = vmatprep.subr.mxu0 0.0
          %1111 = vmatpush1.xpose.msra.mxu0 0.0
          %1112 = vmatprep.subr.mxu0 0.0
          %1113 = vmatpush1.xpose.msra.mxu0 0.0
          %1114 = vmatprep.subr.mxu0 0.0
          %1115 = vmatpush1.xpose.msra.mxu0 0.0
          %1116 = vmatprep.subr.mxu0 0.0
          %1117 = vmatpush1.xpose.msra.mxu0 0.0
          %1118 = vmatprep.subr.mxu0 0.0
          %1119 = vmatpush1.xpose.msra.mxu0 0.0
          %1120 = vmatprep.subr.mxu0 0.0
          %1121 = vmatpush1.xpose.msra.mxu0 0.0
          %1122 = vmatprep.subr.mxu0 0.0
          %1123 = vmatpush1.xpose.msra.mxu0 0.0
          %1124 = vmatprep.subr.mxu0 0.0
          %1125 = vmatpush1.xpose.msra.mxu0 0.0
          %1126 = vmatprep.subr.mxu0 0.0
          %1127 = vmatpush1.xpose.msra.mxu0 0.0
          %1128 = vmatprep.subr.mxu0 0.0
          %1129 = vmatpush1.xpose.msra.mxu0 0.0
          %1130 = vmatprep.subr.mxu0 0.0
          %1131 = vmatpush1.xpose.msra.mxu0 0.0
          %1132 = vmatprep.subr.mxu0 0.0
          %1133 = vmatpush1.xpose.msra.mxu0 0.0
          %1134 = vmatprep.subr.mxu0 0.0
          %1135 = vmatpush1.xpose.msra.mxu0 0.0
          %1136 = vmatprep.subr.mxu0 0.0
          %1137 = vmatpush1.xpose.msra.mxu0 0.0
          %1138 = vmatprep.subr.mxu0 0.0
          %1139 = vmatpush1.xpose.msra.mxu0 0.0
          %1140 = vmatprep.subr.mxu0 0.0
          %1141 = vmatpush1.xpose.msra.mxu0 0.0
          %1142 = vmatprep.subr.mxu0 0.0
          %1143 = vmatpush1.xpose.msra.mxu0 0.0
          %1144 = vmatprep.subr.mxu0 0.0
          %1145 = vmatpush1.xpose.msra.mxu0 0.0
          %1146 = vmatprep.subr.mxu0 0.0
          %1147 = vmatpush1.xpose.msra.mxu0 0.0
          %1148 = vmatprep.subr.mxu0 0.0
          %1149 = vmatpush1.xpose.msra.mxu0 0.0
          %1150 = vmatprep.subr.mxu0 0.0
          %1151 = vmatpush1.xpose.msra.mxu0 0.0
          %1152 = vmatprep.subr.mxu0 0.0
          %1153 = vmatpush1.xpose.msra.mxu0 0.0
          %1154 = vmatprep.subr.mxu0 0.0
          %1155 = vmatpush1.xpose.msra.mxu0 0.0
          %1156 = vmatprep.subr.mxu0 0.0
          %1157 = vmatpush1.xpose.msra.mxu0 0.0
          %1158 = vmatprep.subr.mxu0 0.0
          %1159 = vmatpush1.xpose.msra.mxu0 0.0
          %1160 = vmatprep.mubr.f32.mxu0 0.0
          %1161 = vmatmul.mubr.f32.gmra.mrb[0].mxu0 %v1091
          %v1162 = vpop.f32.mrb[0].mxu0
          %v1163 = vadd.f32 %v1088, %v1162
          %v1164 = vpop.f32.mrb[0].mxu0
          %1165 = vdwg.mxu0
          %vm1166 = vcmask 64512
          %v1167 = vsel %vm1166, %v1163, -inf
          %1168 = vmax.xlane.f32.xlu0 %v1167
          %v1169 = vpop.xlane.xlu0 %1168
          %v1170 = vld [vmem:[#allocation2] sm:$0xff]
          %v1171 = vmax.f32 %v1170, %v1169
          %vm1172 = vcmp.eq.f32.partialorder %v1171, -inf
          %v1173 = vsel %vm1172, 0.0, %v1171
          %v1174 = vsub.f32 %v1170, %v1173
          %v1175 = vmul.f32 %v1174, 1.442695
          %v1176 = vpow.pop %v1175
          %1178 = vset.pattern.permute.xlu0 0
          %1179 = vperm.xlu0 %1178, %v1173
          %v1180 = vpop.permute.xlu0 %1179
          %v1182 = vsub.f32 %v1163, %v1180
          %v1183 = vmul.f32 %v1182, 1.442695
          %v1184 = vpow.pop %v1183
          %v1185 = vld [vmem:[#allocation3] sm:$0xff]
          %v1186 = vmul.f32 %v1176, %v1185
          %v1187 = vsel %vm1166, %v1184, 0.0
          %1188 = vadd.xlane.f32.xlu0 %v1187
          %v1189 = vpop.xlane.xlu0 %1188
          %v1190 = vadd.f32 %v1186, %v1189
          %vm1191 = vcmask 7168
          %1192 = vst.msk [vmem:[#allocation3] sm:$0xff] %vm1191, %v1190
          %v1193 = vld [vmem:[#allocation4] sm:$0xff]
          %1195 = vset.pattern.permute.xlu0 0
          %1196 = vperm.xlu0 %1195, %v1176
          %v1197 = vpop.permute.xlu0 %1196
          %v1199 = vmul.f32 %v1197, %v1193
          %v1201 = vsel %vm1166, %v1184, 0
          %1203 = vmatprep.subr.mxu0 0.0
          %1204 = vmatpush1.msra.mxu0 %v1086
          %1205 = vmatprep.subr.mxu0 0.0
          %1206 = vmatpush1.msra.mxu0 0.0
          %1207 = vmatprep.subr.mxu0 0.0
          %1208 = vmatpush1.msra.mxu0 0.0
          %1209 = vmatprep.subr.mxu0 0.0
          %1210 = vmatpush1.msra.mxu0 0.0
          %1211 = vmatprep.subr.mxu0 0.0
          %1212 = vmatpush1.msra.mxu0 0.0
          %1213 = vmatprep.subr.mxu0 0.0
          %1214 = vmatpush1.msra.mxu0 0.0
          %1215 = vmatprep.subr.mxu0 0.0
          %1216 = vmatpush1.msra.mxu0 0.0
          %1217 = vmatprep.subr.mxu0 0.0
          %1218 = vmatpush1.msra.mxu0 0.0
          %1219 = vmatprep.subr.mxu0 0.0
          %1220 = vmatpush1.msra.mxu0 0.0
          %1221 = vmatprep.subr.mxu0 0.0
          %1222 = vmatpush1.msra.mxu0 0.0
          %1223 = vmatprep.subr.mxu0 0.0
          %1224 = vmatpush1.msra.mxu0 0.0
          %1225 = vmatprep.subr.mxu0 0.0
          %1226 = vmatpush1.msra.mxu0 0.0
          %1227 = vmatprep.subr.mxu0 0.0
          %1228 = vmatpush1.msra.mxu0 0.0
          %1229 = vmatprep.subr.mxu0 0.0
          %1230 = vmatpush1.msra.mxu0 0.0
          %1231 = vmatprep.subr.mxu0 0.0
          %1232 = vmatpush1.msra.mxu0 0.0
          %1233 = vmatprep.subr.mxu0 0.0
          %1234 = vmatpush1.msra.mxu0 0.0
          %1235 = vmatprep.subr.mxu0 0.0
          %1236 = vmatpush1.msra.mxu0 0.0
          %1237 = vmatprep.subr.mxu0 0.0
          %1238 = vmatpush1.msra.mxu0 0.0
          %1239 = vmatprep.subr.mxu0 0.0
          %1240 = vmatpush1.msra.mxu0 0.0
          %1241 = vmatprep.subr.mxu0 0.0
          %1242 = vmatpush1.msra.mxu0 0.0
          %1243 = vmatprep.subr.mxu0 0.0
          %1244 = vmatpush1.msra.mxu0 0.0
          %1245 = vmatprep.subr.mxu0 0.0
          %1246 = vmatpush1.msra.mxu0 0.0
          %1247 = vmatprep.subr.mxu0 0.0
          %1248 = vmatpush1.msra.mxu0 0.0
          %1249 = vmatprep.subr.mxu0 0.0
          %1250 = vmatpush1.msra.mxu0 0.0
          %1251 = vmatprep.subr.mxu0 0.0
          %1252 = vmatpush1.msra.mxu0 0.0
          %1253 = vmatprep.subr.mxu0 0.0
          %1254 = vmatpush1.msra.mxu0 0.0
          %1255 = vmatprep.subr.mxu0 0.0
          %1256 = vmatpush1.msra.mxu0 0.0
          %1257 = vmatprep.subr.mxu0 0.0
          %1258 = vmatpush1.msra.mxu0 0.0
          %1259 = vmatprep.subr.mxu0 0.0
          %1260 = vmatpush1.msra.mxu0 0.0
          %1261 = vmatprep.subr.mxu0 0.0
          %1262 = vmatpush1.msra.mxu0 0.0
          %1263 = vmatprep.subr.mxu0 0.0
          %1264 = vmatpush1.msra.mxu0 0.0
          %1265 = vmatprep.subr.mxu0 0.0
          %1266 = vmatpush1.msra.mxu0 0.0
          %1267 = vmatprep.mubr.f32.mxu0 0.0
          %1268 = vmatmul.mubr.f32.gmra.mrb[0].mxu0 %v1201
          %v1269 = vpop.f32.mrb[0].mxu0
          %v1270 = vadd.f32 0.0, %v1269
          %v1271 = vpop.f32.mrb[0].mxu0
          %1272 = vdwg.mxu0
          %v1273 = vadd.f32 %v1199, %v1270
          %1274 = vst.msk [vmem:[#allocation4] sm:$0xff] %vm1089, %v1273
          %1275 = vst.msk [vmem:[#allocation2] sm:$0xff] %vm1191, %v1171
          %v1276 = vld [vmem:[%s293] sm:$0xff]
          %v1277 = vmul.f32 %v1276, 0.17677669
          %v1278 = vld [vmem:[%s302] sm:$0xff]
          %v1279 = vld [vmem:[%s311] sm:$0xff]
          %s1280 = scalar_lea.vmem %s320, 4 [#allocation11]
          %v1281 = vld [vmem:[%s1280] sm:$0xf]
          %v1282 = vunpack.c.l.bf16 %v1281
          %1284 = vrot.lane.b32.xlu0 %v1277, 96
          %v1285 = vpop.permute.xlu0 %1284
          %1287 = vrot.lane.b32.xlu0 %v1278, 96
          %v1288 = vpop.permute.xlu0 %1287
          %v1289 = vsel %vm1089, %v1285, 0
          %v1291 = vsel %vm1089, %v1288, 0
          %1293 = vmatprep.subr.mxu0 0.0
          %1294 = vmatpush1.xpose.msra.mxu0 %v1291
          %1295 = vmatprep.subr.mxu0 0.0
          %1296 = vmatpush1.xpose.msra.mxu0 0.0
          %1297 = vmatprep.subr.mxu0 0.0
          %1298 = vmatpush1.xpose.msra.mxu0 0.0
          %1299 = vmatprep.subr.mxu0 0.0
          %1300 = vmatpush1.xpose.msra.mxu0 0.0
          %1301 = vmatprep.subr.mxu0 0.0
          %1302 = vmatpush1.xpose.msra.mxu0 0.0
          %1303 = vmatprep.subr.mxu0 0.0
          %1304 = vmatpush1.xpose.msra.mxu0 0.0
          %1305 = vmatprep.subr.mxu0 0.0
          %1306 = vmatpush1.xpose.msra.mxu0 0.0
          %1307 = vmatprep.subr.mxu0 0.0
          %1308 = vmatpush1.xpose.msra.mxu0 0.0
          %1309 = vmatprep.subr.mxu0 0.0
          %1310 = vmatpush1.xpose.msra.mxu0 0.0
          %1311 = vmatprep.subr.mxu0 0.0
          %1312 = vmatpush1.xpose.msra.mxu0 0.0
          %1313 = vmatprep.subr.mxu0 0.0
          %1314 = vmatpush1.xpose.msra.mxu0 0.0
          %1315 = vmatprep.subr.mxu0 0.0
          %1316 = vmatpush1.xpose.msra.mxu0 0.0
          %1317 = vmatprep.subr.mxu0 0.0
          %1318 = vmatpush1.xpose.msra.mxu0 0.0
          %1319 = vmatprep.subr.mxu0 0.0
          %1320 = vmatpush1.xpose.msra.mxu0 0.0
          %1321 = vmatprep.subr.mxu0 0.0
          %1322 = vmatpush1.xpose.msra.mxu0 0.0
          %1323 = vmatprep.subr.mxu0 0.0
          %1324 = vmatpush1.xpose.msra.mxu0 0.0
          %1325 = vmatprep.subr.mxu0 0.0
          %1326 = vmatpush1.xpose.msra.mxu0 0.0
          %1327 = vmatprep.subr.mxu0 0.0
          %1328 = vmatpush1.xpose.msra.mxu0 0.0
          %1329 = vmatprep.subr.mxu0 0.0
          %1330 = vmatpush1.xpose.msra.mxu0 0.0
          %1331 = vmatprep.subr.mxu0 0.0
          %1332 = vmatpush1.xpose.msra.mxu0 0.0
          %1333 = vmatprep.subr.mxu0 0.0
          %1334 = vmatpush1.xpose.msra.mxu0 0.0
          %1335 = vmatprep.subr.mxu0 0.0
          %1336 = vmatpush1.xpose.msra.mxu0 0.0
          %1337 = vmatprep.subr.mxu0 0.0
          %1338 = vmatpush1.xpose.msra.mxu0 0.0
          %1339 = vmatprep.subr.mxu0 0.0
          %1340 = vmatpush1.xpose.msra.mxu0 0.0
          %1341 = vmatprep.subr.mxu0 0.0
          %1342 = vmatpush1.xpose.msra.mxu0 0.0
          %1343 = vmatprep.subr.mxu0 0.0
          %1344 = vmatpush1.xpose.msra.mxu0 0.0
          %1345 = vmatprep.subr.mxu0 0.0
          %1346 = vmatpush1.xpose.msra.mxu0 0.0
          %1347 = vmatprep.subr.mxu0 0.0
          %1348 = vmatpush1.xpose.msra.mxu0 0.0
          %1349 = vmatprep.subr.mxu0 0.0
          %1350 = vmatpush1.xpose.msra.mxu0 0.0
          %1351 = vmatprep.subr.mxu0 0.0
          %1352 = vmatpush1.xpose.msra.mxu0 0.0
          %1353 = vmatprep.subr.mxu0 0.0
          %1354 = vmatpush1.xpose.msra.mxu0 0.0
          %1355 = vmatprep.subr.mxu0 0.0
          %1356 = vmatpush1.xpose.msra.mxu0 0.0
          %1357 = vmatprep.mubr.f32.mxu0 0.0
          %1358 = vmatmul.mubr.f32.gmra.mrb[0].mxu0 %v1289
          %v1359 = vpop.f32.mrb[0].mxu0
          %v1360 = vadd.f32 %v1282, %v1359
          %v1361 = vpop.f32.mrb[0].mxu0
          %1362 = vdwg.mxu0
          %v1363 = vsel %vm1166, %v1360, -inf
          %1364 = vmax.xlane.f32.xlu0 %v1363
          %v1365 = vpop.xlane.xlu0 %1364
          %s1366 = scalar_lea.vmem [#allocation2], 8
          %v1367 = vld [vmem:[%s1366] sm:$0xff]
          %v1368 = vmax.f32 %v1367, %v1365
          %vm1369 = vcmp.eq.f32.partialorder %v1368, -inf
          %v1370 = vsel %vm1369, 0.0, %v1368
          %v1371 = vsub.f32 %v1367, %v1370
          %v1372 = vmul.f32 %v1371, 1.442695
          %v1373 = vpow.pop %v1372
          %1375 = vset.pattern.permute.xlu0 0
          %1376 = vperm.xlu0 %1375, %v1370
          %v1377 = vpop.permute.xlu0 %1376
          %v1379 = vsub.f32 %v1360, %v1377
          %v1380 = vmul.f32 %v1379, 1.442695
          %v1381 = vpow.pop %v1380
          %s1382 = scalar_lea.vmem [#allocation3], 8
          %v1383 = vld [vmem:[%s1382] sm:$0xff]
          %v1384 = vmul.f32 %v1373, %v1383
          %v1385 = vsel %vm1166, %v1381, 0.0
          %1386 = vadd.xlane.f32.xlu0 %v1385
          %v1387 = vpop.xlane.xlu0 %1386
          %v1388 = vadd.f32 %v1384, %v1387
          %1389 = vst.msk [vmem:[%s1382] sm:$0xff] %vm1191, %v1388
          %s1390 = scalar_lea.vmem [#allocation4], 8
          %v1391 = vld [vmem:[%s1390] sm:$0xff]
          %1393 = vset.pattern.permute.xlu0 0
          %1394 = vperm.xlu0 %1393, %v1373
          %v1395 = vpop.permute.xlu0 %1394
          %v1397 = vmul.f32 %v1395, %v1391
          %1399 = vrot.lane.b32.xlu0 %v1279, 96
          %v1400 = vpop.permute.xlu0 %1399
          %v1403 = vsel %vm1166, %v1381, 0
          %1405 = vmatprep.subr.mxu0 0.0
          %1406 = vmatpush1.msra.mxu0 %v1400
          %1407 = vmatprep.subr.mxu0 0.0
          %1408 = vmatpush1.msra.mxu0 0.0
          %1409 = vmatprep.subr.mxu0 0.0
          %1410 = vmatpush1.msra.mxu0 0.0
          %1411 = vmatprep.subr.mxu0 0.0
          %1412 = vmatpush1.msra.mxu0 0.0
          %1413 = vmatprep.subr.mxu0 0.0
          %1414 = vmatpush1.msra.mxu0 0.0
          %1415 = vmatprep.subr.mxu0 0.0
          %1416 = vmatpush1.msra.mxu0 0.0
          %1417 = vmatprep.subr.mxu0 0.0
          %1418 = vmatpush1.msra.mxu0 0.0
          %1419 = vmatprep.subr.mxu0 0.0
          %1420 = vmatpush1.msra.mxu0 0.0
          %1421 = vmatprep.subr.mxu0 0.0
          %1422 = vmatpush1.msra.mxu0 0.0
          %1423 = vmatprep.subr.mxu0 0.0
          %1424 = vmatpush1.msra.mxu0 0.0
          %1425 = vmatprep.subr.mxu0 0.0
          %1426 = vmatpush1.msra.mxu0 0.0
          %1427 = vmatprep.subr.mxu0 0.0
          %1428 = vmatpush1.msra.mxu0 0.0
          %1429 = vmatprep.subr.mxu0 0.0
          %1430 = vmatpush1.msra.mxu0 0.0
          %1431 = vmatprep.subr.mxu0 0.0
          %1432 = vmatpush1.msra.mxu0 0.0
          %1433 = vmatprep.subr.mxu0 0.0
          %1434 = vmatpush1.msra.mxu0 0.0
          %1435 = vmatprep.subr.mxu0 0.0
          %1436 = vmatpush1.msra.mxu0 0.0
          %1437 = vmatprep.subr.mxu0 0.0
          %1438 = vmatpush1.msra.mxu0 0.0
          %1439 = vmatprep.subr.mxu0 0.0
          %1440 = vmatpush1.msra.mxu0 0.0
          %1441 = vmatprep.subr.mxu0 0.0
          %1442 = vmatpush1.msra.mxu0 0.0
          %1443 = vmatprep.subr.mxu0 0.0
          %1444 = vmatpush1.msra.mxu0 0.0
          %1445 = vmatprep.subr.mxu0 0.0
          %1446 = vmatpush1.msra.mxu0 0.0
          %1447 = vmatprep.subr.mxu0 0.0
          %1448 = vmatpush1.msra.mxu0 0.0
          %1449 = vmatprep.subr.mxu0 0.0
          %1450 = vmatpush1.msra.mxu0 0.0
          %1451 = vmatprep.subr.mxu0 0.0
          %1452 = vmatpush1.msra.mxu0 0.0
          %1453 = vmatprep.subr.mxu0 0.0
          %1454 = vmatpush1.msra.mxu0 0.0
          %1455 = vmatprep.subr.mxu0 0.0
          %1456 = vmatpush1.msra.mxu0 0.0
          %1457 = vmatprep.subr.mxu0 0.0
          %1458 = vmatpush1.msra.mxu0 0.0
          %1459 = vmatprep.subr.mxu0 0.0
          %1460 = vmatpush1.msra.mxu0 0.0
          %1461 = vmatprep.subr.mxu0 0.0
          %1462 = vmatpush1.msra.mxu0 0.0
          %1463 = vmatprep.subr.mxu0 0.0
          %1464 = vmatpush1.msra.mxu0 0.0
          %1465 = vmatprep.subr.mxu0 0.0
          %1466 = vmatpush1.msra.mxu0 0.0
          %1467 = vmatprep.subr.mxu0 0.0
          %1468 = vmatpush1.msra.mxu0 0.0
          %1469 = vmatprep.mubr.f32.mxu0 0.0
          %1470 = vmatmul.mubr.f32.gmra.mrb[0].mxu0 %v1403
          %v1471 = vpop.f32.mrb[0].mxu0
          %v1472 = vadd.f32 0.0, %v1471
          %v1473 = vpop.f32.mrb[0].mxu0
          %1474 = vdwg.mxu0
          %v1475 = vadd.f32 %v1397, %v1472
          %1476 = vst.msk [vmem:[%s1390] sm:$0xff] %vm1089, %v1475
          %1477 = vst.msk [vmem:[%s1366] sm:$0xff] %vm1191, %v1368
          %v1478 = vld [vmem:[%s293] sm:$0xff]
          %v1479 = vmul.f32 %v1478, 0.17677669
          %v1480 = vld [vmem:[%s302] sm:$0xff]
          %v1481 = vld [vmem:[%s311] sm:$0xff]
          %s1482 = scalar_lea.vmem %s320, 8 [#allocation11]
          %v1483 = vld [vmem:[%s1482] sm:$0xf]
          %v1484 = vunpack.c.l.bf16 %v1483
          %1486 = vrot.lane.b32.xlu0 %v1479, 64
          %v1487 = vpop.permute.xlu0 %1486
          %1489 = vrot.lane.b32.xlu0 %v1480, 64
          %v1490 = vpop.permute.xlu0 %1489
          %v1491 = vsel %vm1089, %v1487, 0
          %v1493 = vsel %vm1089, %v1490, 0
          %1495 = vmatprep.subr.mxu0 0.0
          %1496 = vmatpush1.xpose.msra.mxu0 %v1493
          %1497 = vmatprep.subr.mxu0 0.0
          %1498 = vmatpush1.xpose.msra.mxu0 0.0
          %1499 = vmatprep.subr.mxu0 0.0
          %1500 = vmatpush1.xpose.msra.mxu0 0.0
          %1501 = vmatprep.subr.mxu0 0.0
          %1502 = vmatpush1.xpose.msra.mxu0 0.0
          %1503 = vmatprep.subr.mxu0 0.0
          %1504 = vmatpush1.xpose.msra.mxu0 0.0
          %1505 = vmatprep.subr.mxu0 0.0
          %1506 = vmatpush1.xpose.msra.mxu0 0.0
          %1507 = vmatprep.subr.mxu0 0.0
          %1508 = vmatpush1.xpose.msra.mxu0 0.0
          %1509 = vmatprep.subr.mxu0 0.0
          %1510 = vmatpush1.xpose.msra.mxu0 0.0
          %1511 = vmatprep.subr.mxu0 0.0
          %1512 = vmatpush1.xpose.msra.mxu0 0.0
          %1513 = vmatprep.subr.mxu0 0.0
          %1514 = vmatpush1.xpose.msra.mxu0 0.0
          %1515 = vmatprep.subr.mxu0 0.0
          %1516 = vmatpush1.xpose.msra.mxu0 0.0
          %1517 = vmatprep.subr.mxu0 0.0
          %1518 = vmatpush1.xpose.msra.mxu0 0.0
          %1519 = vmatprep.subr.mxu0 0.0
          %1520 = vmatpush1.xpose.msra.mxu0 0.0
          %1521 = vmatprep.subr.mxu0 0.0
          %1522 = vmatpush1.xpose.msra.mxu0 0.0
          %1523 = vmatprep.subr.mxu0 0.0
          %1524 = vmatpush1.xpose.msra.mxu0 0.0
          %1525 = vmatprep.subr.mxu0 0.0
          %1526 = vmatpush1.xpose.msra.mxu0 0.0
          %1527 = vmatprep.subr.mxu0 0.0
          %1528 = vmatpush1.xpose.msra.mxu0 0.0
          %1529 = vmatprep.subr.mxu0 0.0
          %1530 = vmatpush1.xpose.msra.mxu0 0.0
          %1531 = vmatprep.subr.mxu0 0.0
          %1532 = vmatpush1.xpose.msra.mxu0 0.0
          %1533 = vmatprep.subr.mxu0 0.0
          %1534 = vmatpush1.xpose.msra.mxu0 0.0
          %1535 = vmatprep.subr.mxu0 0.0
          %1536 = vmatpush1.xpose.msra.mxu0 0.0
          %1537 = vmatprep.subr.mxu0 0.0
          %1538 = vmatpush1.xpose.msra.mxu0 0.0
          %1539 = vmatprep.subr.mxu0 0.0
          %1540 = vmatpush1.xpose.msra.mxu0 0.0
          %1541 = vmatprep.subr.mxu0 0.0
          %1542 = vmatpush1.xpose.msra.mxu0 0.0
          %1543 = vmatprep.subr.mxu0 0.0
          %1544 = vmatpush1.xpose.msra.mxu0 0.0
          %1545 = vmatprep.subr.mxu0 0.0
          %1546 = vmatpush1.xpose.msra.mxu0 0.0
          %1547 = vmatprep.subr.mxu0 0.0
          %1548 = vmatpush1.xpose.msra.mxu0 0.0
          %1549 = vmatprep.subr.mxu0 0.0
          %1550 = vmatpush1.xpose.msra.mxu0 0.0
          %1551 = vmatprep.subr.mxu0 0.0
          %1552 = vmatpush1.xpose.msra.mxu0 0.0
          %1553 = vmatprep.subr.mxu0 0.0
          %1554 = vmatpush1.xpose.msra.mxu0 0.0
          %1555 = vmatprep.subr.mxu0 0.0
          %1556 = vmatpush1.xpose.msra.mxu0 0.0
          %1557 = vmatprep.subr.mxu0 0.0
          %1558 = vmatpush1.xpose.msra.mxu0 0.0
          %1559 = vmatprep.mubr.f32.mxu0 0.0
          %1560 = vmatmul.mubr.f32.gmra.mrb[0].mxu0 %v1491
          %v1561 = vpop.f32.mrb[0].mxu0
          %v1562 = vadd.f32 %v1484, %v1561
          %v1563 = vpop.f32.mrb[0].mxu0
          %1564 = vdwg.mxu0
          %v1565 = vsel %vm1166, %v1562, -inf
          %1566 = vmax.xlane.f32.xlu0 %v1565
          %v1567 = vpop.xlane.xlu0 %1566
          %s1568 = scalar_lea.vmem [#allocation2], 16
          %v1569 = vld [vmem:[%s1568] sm:$0xff]
          %v1570 = vmax.f32 %v1569, %v1567
          %vm1571 = vcmp.eq.f32.partialorder %v1570, -inf
          %v1572 = vsel %vm1571, 0.0, %v1570
          %v1573 = vsub.f32 %v1569, %v1572
          %v1574 = vmul.f32 %v1573, 1.442695
          %v1575 = vpow.pop %v1574
          %1577 = vset.pattern.permute.xlu0 0
          %1578 = vperm.xlu0 %1577, %v1572
          %v1579 = vpop.permute.xlu0 %1578
          %v1581 = vsub.f32 %v1562, %v1579
          %v1582 = vmul.f32 %v1581, 1.442695
          %v1583 = vpow.pop %v1582
          %s1584 = scalar_lea.vmem [#allocation3], 16
          %v1585 = vld [vmem:[%s1584] sm:$0xff]
          %v1586 = vmul.f32 %v1575, %v1585
          %v1587 = vsel %vm1166, %v1583, 0.0
          %1588 = vadd.xlane.f32.xlu0 %v1587
          %v1589 = vpop.xlane.xlu0 %1588
          %v1590 = vadd.f32 %v1586, %v1589
          %1591 = vst.msk [vmem:[%s1584] sm:$0xff] %vm1191, %v1590
          %s1592 = scalar_lea.vmem [#allocation4], 16
          %v1593 = vld [vmem:[%s1592] sm:$0xff]
          %1595 = vset.pattern.permute.xlu0 0
          %1596 = vperm.xlu0 %1595, %v1575
          %v1597 = vpop.permute.xlu0 %1596
          %v1599 = vmul.f32 %v1597, %v1593
          %1601 = vrot.lane.b32.xlu0 %v1481, 64
          %v1602 = vpop.permute.xlu0 %1601
          %v1605 = vsel %vm1166, %v1583, 0
          %1607 = vmatprep.subr.mxu0 0.0
          %1608 = vmatpush1.msra.mxu0 %v1602
          %1609 = vmatprep.subr.mxu0 0.0
          %1610 = vmatpush1.msra.mxu0 0.0
          %1611 = vmatprep.subr.mxu0 0.0
          %1612 = vmatpush1.msra.mxu0 0.0
          %1613 = vmatprep.subr.mxu0 0.0
          %1614 = vmatpush1.msra.mxu0 0.0
          %1615 = vmatprep.subr.mxu0 0.0
          %1616 = vmatpush1.msra.mxu0 0.0
          %1617 = vmatprep.subr.mxu0 0.0
          %1618 = vmatpush1.msra.mxu0 0.0
          %1619 = vmatprep.subr.mxu0 0.0
          %1620 = vmatpush1.msra.mxu0 0.0
          %1621 = vmatprep.subr.mxu0 0.0
          %1622 = vmatpush1.msra.mxu0 0.0
          %1623 = vmatprep.subr.mxu0 0.0
          %1624 = vmatpush1.msra.mxu0 0.0
          %1625 = vmatprep.subr.mxu0 0.0
          %1626 = vmatpush1.msra.mxu0 0.0
          %1627 = vmatprep.subr.mxu0 0.0
          %1628 = vmatpush1.msra.mxu0 0.0
          %1629 = vmatprep.subr.mxu0 0.0
          %1630 = vmatpush1.msra.mxu0 0.0
          %1631 = vmatprep.subr.mxu0 0.0
          %1632 = vmatpush1.msra.mxu0 0.0
          %1633 = vmatprep.subr.mxu0 0.0
          %1634 = vmatpush1.msra.mxu0 0.0
          %1635 = vmatprep.subr.mxu0 0.0
          %1636 = vmatpush1.msra.mxu0 0.0
          %1637 = vmatprep.subr.mxu0 0.0
          %1638 = vmatpush1.msra.mxu0 0.0
          %1639 = vmatprep.subr.mxu0 0.0
          %1640 = vmatpush1.msra.mxu0 0.0
          %1641 = vmatprep.subr.mxu0 0.0
          %1642 = vmatpush1.msra.mxu0 0.0
          %1643 = vmatprep.subr.mxu0 0.0
          %1644 = vmatpush1.msra.mxu0 0.0
          %1645 = vmatprep.subr.mxu0 0.0
          %1646 = vmatpush1.msra.mxu0 0.0
          %1647 = vmatprep.subr.mxu0 0.0
          %1648 = vmatpush1.msra.mxu0 0.0
          %1649 = vmatprep.subr.mxu0 0.0
          %1650 = vmatpush1.msra.mxu0 0.0
          %1651 = vmatprep.subr.mxu0 0.0
          %1652 = vmatpush1.msra.mxu0 0.0
          %1653 = vmatprep.subr.mxu0 0.0
          %1654 = vmatpush1.msra.mxu0 0.0
          %1655 = vmatprep.subr.mxu0 0.0
          %1656 = vmatpush1.msra.mxu0 0.0
          %1657 = vmatprep.subr.mxu0 0.0
          %1658 = vmatpush1.msra.mxu0 0.0
          %1659 = vmatprep.subr.mxu0 0.0
          %1660 = vmatpush1.msra.mxu0 0.0
          %1661 = vmatprep.subr.mxu0 0.0
          %1662 = vmatpush1.msra.mxu0 0.0
          %1663 = vmatprep.subr.mxu0 0.0
          %1664 = vmatpush1.msra.mxu0 0.0
          %1665 = vmatprep.subr.mxu0 0.0
          %1666 = vmatpush1.msra.mxu0 0.0
          %1667 = vmatprep.subr.mxu0 0.0
          %1668 = vmatpush1.msra.mxu0 0.0
          %1669 = vmatprep.subr.mxu0 0.0
          %1670 = vmatpush1.msra.mxu0 0.0
          %1671 = vmatprep.mubr.f32.mxu0 0.0
          %1672 = vmatmul.mubr.f32.gmra.mrb[0].mxu0 %v1605
          %v1673 = vpop.f32.mrb[0].mxu0
          %v1674 = vadd.f32 0.0, %v1673
          %v1675 = vpop.f32.mrb[0].mxu0
          %1676 = vdwg.mxu0
          %v1677 = vadd.f32 %v1599, %v1674
          %1678 = vst.msk [vmem:[%s1592] sm:$0xff] %vm1089, %v1677
          %1679 = vst.msk [vmem:[%s1568] sm:$0xff] %vm1191, %v1570
          %v1680 = vld [vmem:[%s293] sm:$0xff]
          %v1681 = vmul.f32 %v1680, 0.17677669
          %v1682 = vld [vmem:[%s302] sm:$0xff]
          %v1683 = vld [vmem:[%s311] sm:$0xff]
          %s1684 = scalar_lea.vmem %s320, 12 [#allocation11]
          %v1685 = vld [vmem:[%s1684] sm:$0xf]
          %v1686 = vunpack.c.l.bf16 %v1685
          %1688 = vrot.lane.b32.xlu0 %v1681, 32
          %v1689 = vpop.permute.xlu0 %1688
          %1691 = vrot.lane.b32.xlu0 %v1682, 32
          %v1692 = vpop.permute.xlu0 %1691
          %v1693 = vsel %vm1089, %v1689, 0
          %v1695 = vsel %vm1089, %v1692, 0
          %1697 = vmatprep.subr.mxu0 0.0
          %1698 = vmatpush1.xpose.msra.mxu0 %v1695
          %1699 = vmatprep.subr.mxu0 0.0
          %1700 = vmatpush1.xpose.msra.mxu0 0.0
          %1701 = vmatprep.subr.mxu0 0.0
          %1702 = vmatpush1.xpose.msra.mxu0 0.0
          %1703 = vmatprep.subr.mxu0 0.0
          %1704 = vmatpush1.xpose.msra.mxu0 0.0
          %1705 = vmatprep.subr.mxu0 0.0
          %1706 = vmatpush1.xpose.msra.mxu0 0.0
          %1707 = vmatprep.subr.mxu0 0.0
          %1708 = vmatpush1.xpose.msra.mxu0 0.0
          %1709 = vmatprep.subr.mxu0 0.0
          %1710 = vmatpush1.xpose.msra.mxu0 0.0
          %1711 = vmatprep.subr.mxu0 0.0
          %1712 = vmatpush1.xpose.msra.mxu0 0.0
          %1713 = vmatprep.subr.mxu0 0.0
          %1714 = vmatpush1.xpose.msra.mxu0 0.0
          %1715 = vmatprep.subr.mxu0 0.0
          %1716 = vmatpush1.xpose.msra.mxu0 0.0
          %1717 = vmatprep.subr.mxu0 0.0
          %1718 = vmatpush1.xpose.msra.mxu0 0.0
          %1719 = vmatprep.subr.mxu0 0.0
          %1720 = vmatpush1.xpose.msra.mxu0 0.0
          %1721 = vmatprep.subr.mxu0 0.0
          %1722 = vmatpush1.xpose.msra.mxu0 0.0
          %1723 = vmatprep.subr.mxu0 0.0
          %1724 = vmatpush1.xpose.msra.mxu0 0.0
          %1725 = vmatprep.subr.mxu0 0.0
          %1726 = vmatpush1.xpose.msra.mxu0 0.0
          %1727 = vmatprep.subr.mxu0 0.0
          %1728 = vmatpush1.xpose.msra.mxu0 0.0
          %1729 = vmatprep.subr.mxu0 0.0
          %1730 = vmatpush1.xpose.msra.mxu0 0.0
          %1731 = vmatprep.subr.mxu0 0.0
          %1732 = vmatpush1.xpose.msra.mxu0 0.0
          %1733 = vmatprep.subr.mxu0 0.0
          %1734 = vmatpush1.xpose.msra.mxu0 0.0
          %1735 = vmatprep.subr.mxu0 0.0
          %1736 = vmatpush1.xpose.msra.mxu0 0.0
          %1737 = vmatprep.subr.mxu0 0.0
          %1738 = vmatpush1.xpose.msra.mxu0 0.0
          %1739 = vmatprep.subr.mxu0 0.0
          %1740 = vmatpush1.xpose.msra.mxu0 0.0
          %1741 = vmatprep.subr.mxu0 0.0
          %1742 = vmatpush1.xpose.msra.mxu0 0.0
          %1743 = vmatprep.subr.mxu0 0.0
          %1744 = vmatpush1.xpose.msra.mxu0 0.0
          %1745 = vmatprep.subr.mxu0 0.0
          %1746 = vmatpush1.xpose.msra.mxu0 0.0
          %1747 = vmatprep.subr.mxu0 0.0
          %1748 = vmatpush1.xpose.msra.mxu0 0.0
          %1749 = vmatprep.subr.mxu0 0.0
          %1750 = vmatpush1.xpose.msra.mxu0 0.0
          %1751 = vmatprep.subr.mxu0 0.0
          %1752 = vmatpush1.xpose.msra.mxu0 0.0
          %1753 = vmatprep.subr.mxu0 0.0
          %1754 = vmatpush1.xpose.msra.mxu0 0.0
          %1755 = vmatprep.subr.mxu0 0.0
          %1756 = vmatpush1.xpose.msra.mxu0 0.0
          %1757 = vmatprep.subr.mxu0 0.0
          %1758 = vmatpush1.xpose.msra.mxu0 0.0
          %1759 = vmatprep.subr.mxu0 0.0
          %1760 = vmatpush1.xpose.msra.mxu0 0.0
          %1761 = vmatprep.mubr.f32.mxu0 0.0
          %1762 = vmatmul.mubr.f32.gmra.mrb[0].mxu0 %v1693
          %v1763 = vpop.f32.mrb[0].mxu0
          %v1764 = vadd.f32 %v1686, %v1763
          %v1765 = vpop.f32.mrb[0].mxu0
          %1766 = vdwg.mxu0
          %v1767 = vsel %vm1166, %v1764, -inf
          %1768 = vmax.xlane.f32.xlu0 %v1767
          %v1769 = vpop.xlane.xlu0 %1768
          %s1770 = scalar_lea.vmem [#allocation2], 24
          %v1771 = vld [vmem:[%s1770] sm:$0xff]
          %v1772 = vmax.f32 %v1771, %v1769
          %vm1773 = vcmp.eq.f32.partialorder %v1772, -inf
          %v1774 = vsel %vm1773, 0.0, %v1772
          %v1775 = vsub.f32 %v1771, %v1774
          %v1776 = vmul.f32 %v1775, 1.442695
          %v1777 = vpow.pop %v1776
          %1779 = vset.pattern.permute.xlu0 0
          %1780 = vperm.xlu0 %1779, %v1774
          %v1781 = vpop.permute.xlu0 %1780
          %v1783 = vsub.f32 %v1764, %v1781
          %v1784 = vmul.f32 %v1783, 1.442695
          %v1785 = vpow.pop %v1784
          %s1786 = scalar_lea.vmem [#allocation3], 24
          %v1787 = vld [vmem:[%s1786] sm:$0xff]
          %v1788 = vmul.f32 %v1777, %v1787
          %v1789 = vsel %vm1166, %v1785, 0.0
          %1790 = vadd.xlane.f32.xlu0 %v1789
          %v1791 = vpop.xlane.xlu0 %1790
          %v1792 = vadd.f32 %v1788, %v1791
          %1793 = vst.msk [vmem:[%s1786] sm:$0xff] %vm1191, %v1792
          %s1794 = scalar_lea.vmem [#allocation4], 24
          %v1795 = vld [vmem:[%s1794] sm:$0xff]
          %1797 = vset.pattern.permute.xlu0 0
          %1798 = vperm.xlu0 %1797, %v1777
          %v1799 = vpop.permute.xlu0 %1798
          %v1801 = vmul.f32 %v1799, %v1795
          %1803 = vrot.lane.b32.xlu0 %v1683, 32
          %v1804 = vpop.permute.xlu0 %1803
          %v1807 = vsel %vm1166, %v1785, 0
          %1809 = vmatprep.subr.mxu0 0.0
          %1810 = vmatpush1.msra.mxu0 %v1804
          %1811 = vmatprep.subr.mxu0 0.0
          %1812 = vmatpush1.msra.mxu0 0.0
          %1813 = vmatprep.subr.mxu0 0.0
          %1814 = vmatpush1.msra.mxu0 0.0
          %1815 = vmatprep.subr.mxu0 0.0
          %1816 = vmatpush1.msra.mxu0 0.0
          %1817 = vmatprep.subr.mxu0 0.0
          %1818 = vmatpush1.msra.mxu0 0.0
          %1819 = vmatprep.subr.mxu0 0.0
          %1820 = vmatpush1.msra.mxu0 0.0
          %1821 = vmatprep.subr.mxu0 0.0
          %1822 = vmatpush1.msra.mxu0 0.0
          %1823 = vmatprep.subr.mxu0 0.0
          %1824 = vmatpush1.msra.mxu0 0.0
          %1825 = vmatprep.subr.mxu0 0.0
          %1826 = vmatpush1.msra.mxu0 0.0
          %1827 = vmatprep.subr.mxu0 0.0
          %1828 = vmatpush1.msra.mxu0 0.0
          %1829 = vmatprep.subr.mxu0 0.0
          %1830 = vmatpush1.msra.mxu0 0.0
          %1831 = vmatprep.subr.mxu0 0.0
          %1832 = vmatpush1.msra.mxu0 0.0
          %1833 = vmatprep.subr.mxu0 0.0
          %1834 = vmatpush1.msra.mxu0 0.0
          %1835 = vmatprep.subr.mxu0 0.0
          %1836 = vmatpush1.msra.mxu0 0.0
          %1837 = vmatprep.subr.mxu0 0.0
          %1838 = vmatpush1.msra.mxu0 0.0
          %1839 = vmatprep.subr.mxu0 0.0
          %1840 = vmatpush1.msra.mxu0 0.0
          %1841 = vmatprep.subr.mxu0 0.0
          %1842 = vmatpush1.msra.mxu0 0.0
          %1843 = vmatprep.subr.mxu0 0.0
          %1844 = vmatpush1.msra.mxu0 0.0
          %1845 = vmatprep.subr.mxu0 0.0
          %1846 = vmatpush1.msra.mxu0 0.0
          %1847 = vmatprep.subr.mxu0 0.0
          %1848 = vmatpush1.msra.mxu0 0.0
          %1849 = vmatprep.subr.mxu0 0.0
          %1850 = vmatpush1.msra.mxu0 0.0
          %1851 = vmatprep.subr.mxu0 0.0
          %1852 = vmatpush1.msra.mxu0 0.0
          %1853 = vmatprep.subr.mxu0 0.0
          %1854 = vmatpush1.msra.mxu0 0.0
          %1855 = vmatprep.subr.mxu0 0.0
          %1856 = vmatpush1.msra.mxu0 0.0
          %1857 = vmatprep.subr.mxu0 0.0
          %1858 = vmatpush1.msra.mxu0 0.0
          %1859 = vmatprep.subr.mxu0 0.0
          %1860 = vmatpush1.msra.mxu0 0.0
          %1861 = vmatprep.subr.mxu0 0.0
          %1862 = vmatpush1.msra.mxu0 0.0
          %1863 = vmatprep.subr.mxu0 0.0
          %1864 = vmatpush1.msra.mxu0 0.0
          %1865 = vmatprep.subr.mxu0 0.0
          %1866 = vmatpush1.msra.mxu0 0.0
          %1867 = vmatprep.subr.mxu0 0.0
          %1868 = vmatpush1.msra.mxu0 0.0
          %1869 = vmatprep.subr.mxu0 0.0
          %1870 = vmatpush1.msra.mxu0 0.0
          %1871 = vmatprep.subr.mxu0 0.0
          %1872 = vmatpush1.msra.mxu0 0.0
          %1873 = vmatprep.mubr.f32.mxu0 0.0
          %1874 = vmatmul.mubr.f32.gmra.mrb[0].mxu0 %v1807
          %v1875 = vpop.f32.mrb[0].mxu0
          %v1876 = vadd.f32 0.0, %v1875
          %v1877 = vpop.f32.mrb[0].mxu0
          %1878 = vdwg.mxu0
          %v1879 = vadd.f32 %v1801, %v1876
          %1880 = vst.msk [vmem:[%s1794] sm:$0xff] %vm1089, %v1879
          %1881 = vst.msk [vmem:[%s1770] sm:$0xff] %vm1191, %v1772
        $region60: #{tpu_custom_call.1} parent=35 // pred_fallthru
          _
        // Predicated region
        $region61: #{tpu_custom_call.1} parent=35 // pred_check
          %p1882 = pneg %p360
        $region62: #{tpu_custom_call.1} parent=35 // pred_check_branch
          %1884 = sbr.rel (%p1882) target = $region64
        $region63: #{tpu_custom_call.1} parent=35 // pred_region
          %v1885 = vld [vmem:[#allocation3] sm:$0xff]
          %v1886 = vrcp.pop %v1885
          %v1887 = vld [vmem:[#allocation4] sm:$0xff]
          %1889 = vset.pattern.permute.xlu0 0
          %1890 = vperm.xlu0 %1889, %v1886
          %v1891 = vpop.permute.xlu0 %1890
          %v1893 = vmul.f32 %v1887, %v1891
          %s1894 = scalar_lea.vmem [#allocation3], 8
          %v1895 = vld [vmem:[%s1894] sm:$0xff]
          %v1896 = vrcp.pop %v1895
          %s1897 = scalar_lea.vmem [#allocation4], 8
          %v1898 = vld [vmem:[%s1897] sm:$0xff]
          %1900 = vset.pattern.permute.xlu0 0
          %1901 = vperm.xlu0 %1900, %v1896
          %v1902 = vpop.permute.xlu0 %1901
          %v1904 = vmul.f32 %v1898, %v1902
          %s1905 = scalar_lea.vmem [#allocation3], 16
          %v1906 = vld [vmem:[%s1905] sm:$0xff]
          %v1907 = vrcp.pop %v1906
          %s1908 = scalar_lea.vmem [#allocation4], 16
          %v1909 = vld [vmem:[%s1908] sm:$0xff]
          %1911 = vset.pattern.permute.xlu0 0
          %1912 = vperm.xlu0 %1911, %v1907
          %v1913 = vpop.permute.xlu0 %1912
          %v1915 = vmul.f32 %v1909, %v1913
          %s1916 = scalar_lea.vmem [#allocation3], 24
          %v1917 = vld [vmem:[%s1916] sm:$0xff]
          %v1918 = vrcp.pop %v1917
          %s1919 = scalar_lea.vmem [#allocation4], 24
          %v1920 = vld [vmem:[%s1919] sm:$0xff]
          %1922 = vset.pattern.permute.xlu0 0
          %1923 = vperm.xlu0 %1922, %v1918
          %v1924 = vpop.permute.xlu0 %1923
          %v1926 = vmul.f32 %v1920, %v1924
          %1928 = vrot.lane.b32.xlu0 %v1904, 32
          %v1929 = vpop.permute.xlu0 %1928
          %1932 = vrot.lane.b32.xlu0 %v1915, 64
          %v1933 = vpop.permute.xlu0 %1932
          %1936 = vrot.lane.b32.xlu0 %v1926, 96
          %v1937 = vpop.permute.xlu0 %1936
          %vm1939 = vcmask 261120
          %v1940 = vsel %vm1939, %v1893, %v1929
          %vm1941 = vcmask 523264
          %v1942 = vsel %vm1941, %v1940, %v1933
          %vm1943 = vcmask 785408
          %v1944 = vsel %vm1943, %v1942, %v1937
          %1945 = vst [vmem:[%s359] sm:$0xff] %v1944
        $region64: #{tpu_custom_call.1} parent=35 // pred_fallthru
          _
        %s1946 = sand.u32 %s170, 1
        %s1947 = scalar_lea.sflag [#allocation7], %s1946
        %s1948 = sand.u32 %s170, 1
        %s1949 = smul.addr %s1948, 8
        %s1950 = scalar_lea.vmem [#allocation13], %s1949
        // Predicated region
        $region65: #{tpu_custom_call.1} parent=35 // pred_check
          %p1951 = pneg %p180
        $region66: #{tpu_custom_call.1} parent=35 // pred_check_branch
          %1953 = sbr.rel (%p1951) target = $region68
        $region67: #{tpu_custom_call.1} parent=35 // pred_region
          %s1955 = ssub.s32 128, 128
          %1956 = vsyncadd %s1947, %s1955
          %s1957 = sadd.s32 %s33, %s32
          %s1958 = smul.addr %s1957, 128
          %s1959 = scalar_lea.hbm %s4, %s1958
          %s1961 = sshll.u32 %s1950, 4
          %s1962 = int_to_ptr.vmem [resolvable:$true] %s1961
          %1964 = dma.vmem_to_hbm [thread:$0]  %s1962, 128, %s1959, %s1947
        $region68: #{tpu_custom_call.1} parent=35 // pred_fallthru
          _
      $region36: #{tpu_custom_call.1} parent=5 // pred_fallthru
        _
      %p1965 = scmp.le.s32.totalorder 2, %s22
      // Predicated region
      $region69: #{tpu_custom_call.1} parent=5 // pred_check
        %p1966 = pneg %p1965
      $region70: #{tpu_custom_call.1} parent=5 // pred_check_branch
        %1968 = sbr.rel (%p1966) target = $region72
      $region71: #{tpu_custom_call.1} parent=5 // pred_region
        %s1969 = ssub.s32 %s22, 2
        // Predicated region
        $region73: #{tpu_custom_call.1} parent=71 // pred_check
          %p1970 = pneg %p186
        $region74: #{tpu_custom_call.1} parent=71 // pred_check_branch
          %1972 = sbr.rel (%p1970) target = $region76
        $region75: #{tpu_custom_call.1} parent=71 // pred_region
          %s1973 = sand.u32 %s171, 1
          %s1974 = scalar_lea.sflag [#allocation7], %s1973
          %s1975 = sand.u32 %s171, 1
          %s1976 = smul.addr %s1975, 8
          %s1977 = scalar_lea.vmem [#allocation13], %s1976
          %1978 = dma.done %s1974, 128
        $region76: #{tpu_custom_call.1} parent=71 // pred_fallthru
          _
      $region72: #{tpu_custom_call.1} parent=5 // pred_fallthru
        _
    $region6: #{tpu_custom_call.1} parent=1 // loop_footer
      %s26 = sadd.s32 1, %s22
    $region7: #{tpu_custom_call.1} parent=1 // loop_footer_branch
      %21 = sbr.rel target = $region3
    $region8: #{tpu_custom_call.1} parent=1 // loop_exit
      _
    %1979 = vsyncpa [#allocation6], 1
    %s1980 = scalar_lea.sflag [#allocation6], 1
    %1981 = vsyncpa %s1980, 1
    %1982 = vsyncpa [#allocation9], 1
    %s1983 = scalar_lea.sflag [#allocation9], 1
    %1984 = vsyncpa %s1983, 1
    %1985 = vsyncpa [#allocation12], 1
    %s1986 = scalar_lea.sflag [#allocation12], 1
    %1987 = vsyncpa %s1986, 1
    %1988 = vsyncpa [#allocation7], 1
    %s1989 = scalar_lea.sflag [#allocation7], 1
    %1990 = vsyncpa %s1989, 1

</llo_original>
